<compile_context>
chip_gen: v7x
topology: tpu7x:2x2x1
jax: 0.10.0
libtpu: 0.0.40
codegen_flags: <defaults>
</compile_context>

<pallas_src>
import jax
import jax.numpy as jnp
from jax.experimental import pallas as pl
from jax.experimental.pallas import tpu as pltpu


def _make_dna_cnn_kernel(n_filters, in_channels, kernel_size, tl):
    """Per-tile kernel: one (F, TL) output tile of ReLU(conv1d(x) + b)."""
    K = kernel_size
    C = in_channels

    def kernel(xc_ref, xh_ref, w_ref, b_ref, o_ref):
        # xc_ref : (C, TL)   bf16  current length tile of the globally left-padded input
        # xh_ref : (C, 128)  bf16  right halo (next 128 columns; 128 >= K-1)
        # w_ref  : (F, K*C)  bf16  resident im2col weight, rows ordered (k, c)
        # b_ref  : (F, 1)    f32   resident bias
        # o_ref  : (F, TL)   output dtype
        xcat = jnp.concatenate([xc_ref[...], xh_ref[...]], axis=-1)          # (C, TL+128)
        # im2col slab: slab[k*C + c, l] = xcat[c, k + l]  (static shifted slices)
        slab = jnp.concatenate([xcat[:, k:k + tl] for k in range(K)], axis=0)  # (K*C, TL)
        # Single MXU matmul, accumulation stays in the MXU (f32).
        acc = jnp.dot(w_ref[...], slab, preferred_element_type=jnp.float32)    # (F, TL)
        y = acc + b_ref[...]                                                   # bias (F,1)
        o_ref[...] = jnp.maximum(y, 0.0).astype(o_ref.dtype)                   # ReLU

    return kernel


def dna_cnn_forward(x, weight, bias, *, modes=None, tl=2048, out_dtype=None):
    """ReLU(Conv1d(x, weight, bias, padding='same')) in NCL layout.

    x        : (N, C_in, L) float32        -- PyTorch NCL input
    weight   : (n_filters, C_in, K) float32 -- PyTorch Conv1d weight layout
    bias     : (n_filters,) float32
    modes    : optional index array selecting a subset of filters (Conv1dWrapper `modes`)
    tl       : length tile; multiple of 128 (sweep 1024..4096; 2048 default)
    out_dtype: output dtype (default x.dtype; pass jnp.bfloat16 to halve store traffic)
    """
    if modes is not None:
        weight = weight[modes]
        bias = bias[modes]

    N, C, L = x.shape
    F, C_w, K = weight.shape
    assert C_w == C, "weight in_channels must match x"
    assert K % 2 == 1, "same-padding conv assumes odd kernel_size (module default 21)"
    assert tl % 128 == 0, "tl must be a multiple of 128"
    assert K - 1 <= 128, "halo is a single 128-wide lane block; kernel_size must be <= 129"
    P = K // 2

    n_tiles = pl.cdiv(L, tl)
    Lp = n_tiles * tl + 128          # 128 extra columns so the last tile's halo block exists
    # 'same' conv zero padding (P on the left) + right padding up to Lp; bf16 (one-hot exact).
    xp = jnp.pad(x, ((0, 0), (0, 0), (P, Lp - P - L))).astype(jnp.bfloat16)

    # (F, C, K) -> (F, K, C) -> (F, K*C), matching the slab's (k, c) row ordering.
    w2d = jnp.transpose(weight, (0, 2, 1)).reshape(F, K * C).astype(jnp.bfloat16)
    b2 = bias.reshape(F, 1).astype(jnp.float32)

    out_dtype = x.dtype if out_dtype is None else out_dtype
    halo_blocks = tl // 128

    kernel = _make_dna_cnn_kernel(F, C, K, tl)
    out = pl.pallas_call(
        kernel,
        out_shape=jax.ShapeDtypeStruct((N, F, n_tiles * tl), out_dtype),
        grid_spec=pltpu.PrefetchScalarGridSpec(
            num_scalar_prefetch=0,
            grid=(N, n_tiles),
            in_specs=[
                # current length tile
                pl.BlockSpec((None, C, tl), lambda n, j: (n, 0, j)),
                # 128-column right halo (block units of 128 along the padded length)
                pl.BlockSpec((None, C, 128),
                             lambda n, j: (n, 0, (j + 1) * halo_blocks)),
                # resident im2col weight and bias
                pl.BlockSpec((F, K * C), lambda n, j: (0, 0)),
                pl.BlockSpec((F, 1), lambda n, j: (0, 0)),
            ],
            out_specs=pl.BlockSpec((None, F, tl), lambda n, j: (n, 0, j)),
        ),
        compiler_params=pltpu.CompilerParams(
            dimension_semantics=("parallel", "parallel"),
            vmem_limit_bytes=32 * 1024 * 1024,
        ),
    )(xp, xp, w2d, b2)

    return out[:, :, :L]


def dna_cnn_reference(x, weight, bias):
    """Pure-JAX f32 reference mirroring PyTorch Conv1d(padding=K//2) + ReLU."""
    N, C, L = x.shape
    F, _, K = weight.shape
    P = K // 2
    xp = jnp.pad(x, ((0, 0), (0, 0), (P, P)))
    cols = jnp.stack([xp[:, :, k:k + L] for k in range(K)], axis=-1)   # (N, C, L, K)
    y = jnp.einsum("fck,nclk->nfl", weight, cols) + bias[None, :, None]
    return jnp.maximum(y, 0.0)


if __name__ == "__main__":
    key = jax.random.PRNGKey(0)
    k_x, k_w, k_b = jax.random.split(key, 3)

    # Small shapes consistent with the module: DNA one-hot in_channels=4,
    # n_filters=64, kernel_size=21, short sequence.
    N, C_in, L = 2, 4, 16
    n_filters, kernel_size = 64, 21

    x = jax.random.normal(k_x, (N, C_in, L), dtype=jnp.float32)
    weight = jax.random.normal(k_w, (n_filters, C_in, kernel_size), dtype=jnp.float32) * 0.1
    bias = jax.random.normal(k_b, (n_filters,), dtype=jnp.float32) * 0.1

    out = dna_cnn_forward(x, weight, bias)
    out = jax.block_until_ready(out)

    ref = dna_cnn_reference(x, weight, bias)
    assert out.shape == (N, n_filters, L)
    # bf16 activations/weights on the MXU vs f32 reference -> loose-ish tolerance.
    # (In production the input is one-hot, exact in bf16; only ~2^-9 weight rounding remains.)
    assert jnp.allclose(out, ref, atol=3e-2, rtol=3e-2), float(jnp.max(jnp.abs(out - ref)))

    print("KERNEL_OK")
</pallas_src>

<mosaic_0001>
module attributes {stable_mosaic.version = 11 : i64} {
  func.func @kernel(%arg0: i32, %arg1: i32, %arg2: memref<1x4x2048xbf16, #tpu.memory_space<vmem>>, %arg3: memref<1x4x128xbf16, #tpu.memory_space<vmem>>, %arg4: memref<64x84xbf16, #tpu.memory_space<vmem>>, %arg5: memref<64x1xf32, #tpu.memory_space<vmem>>, %arg6: memref<1x64x2048xf32, #tpu.memory_space<vmem>>) attributes {dimension_semantics = [#tpu.dimension_semantics<parallel>, #tpu.dimension_semantics<parallel>], iteration_bounds = array<i64: 2, 1>, scalar_prefetch = 0 : i64, scratch_operands = 0 : i64, tpu.core_type = #tpu.core_type<tc>, window_params = [{transform_indices = @transform_0, window_bounds = array<i64: 1, 4, 2048>}, {transform_indices = @transform_1, window_bounds = array<i64: 1, 4, 128>}, {pipeline_mode = #tpu.pipeline_mode<synchronous>, transform_indices = @transform_2, window_bounds = array<i64: 64, 84>}, {pipeline_mode = #tpu.pipeline_mode<synchronous>, transform_indices = @transform_3, window_bounds = array<i64: 64, 1>}, {transform_indices = @transform_4, window_bounds = array<i64: 1, 64, 2048>}]} {
    %c0 = arith.constant 0 : index
    %c0_0 = arith.constant 0 : index
    %c0_1 = arith.constant 0 : index
    %0 = vector.load %arg2[%c0, %c0_0, %c0_1] : memref<1x4x2048xbf16, #tpu.memory_space<vmem>>, vector<1x4x2048xbf16>
    %1 = vector.shape_cast %0 : vector<1x4x2048xbf16> to vector<4x2048xbf16>
    %c0_2 = arith.constant 0 : index
    %c0_3 = arith.constant 0 : index
    %c0_4 = arith.constant 0 : index
    %2 = vector.load %arg3[%c0_2, %c0_3, %c0_4] : memref<1x4x128xbf16, #tpu.memory_space<vmem>>, vector<1x4x128xbf16>
    %3 = vector.shape_cast %2 : vector<1x4x128xbf16> to vector<4x128xbf16>
    %4 = tpu.concatenate %1, %3 in 1 : vector<4x2048xbf16>, vector<4x128xbf16> -> vector<4x2176xbf16>
    %5 = vector.extract_strided_slice %4 {offsets = [0, 0], sizes = [4, 2048], strides = [1, 1]} : vector<4x2176xbf16> to vector<4x2048xbf16>
    %6 = vector.extract_strided_slice %4 {offsets = [0, 1], sizes = [4, 2048], strides = [1, 1]} : vector<4x2176xbf16> to vector<4x2048xbf16>
    %7 = vector.extract_strided_slice %4 {offsets = [0, 2], sizes = [4, 2048], strides = [1, 1]} : vector<4x2176xbf16> to vector<4x2048xbf16>
    %8 = vector.extract_strided_slice %4 {offsets = [0, 3], sizes = [4, 2048], strides = [1, 1]} : vector<4x2176xbf16> to vector<4x2048xbf16>
    %9 = vector.extract_strided_slice %4 {offsets = [0, 4], sizes = [4, 2048], strides = [1, 1]} : vector<4x2176xbf16> to vector<4x2048xbf16>
    %10 = vector.extract_strided_slice %4 {offsets = [0, 5], sizes = [4, 2048], strides = [1, 1]} : vector<4x2176xbf16> to vector<4x2048xbf16>
    %11 = vector.extract_strided_slice %4 {offsets = [0, 6], sizes = [4, 2048], strides = [1, 1]} : vector<4x2176xbf16> to vector<4x2048xbf16>
    %12 = vector.extract_strided_slice %4 {offsets = [0, 7], sizes = [4, 2048], strides = [1, 1]} : vector<4x2176xbf16> to vector<4x2048xbf16>
    %13 = vector.extract_strided_slice %4 {offsets = [0, 8], sizes = [4, 2048], strides = [1, 1]} : vector<4x2176xbf16> to vector<4x2048xbf16>
    %14 = vector.extract_strided_slice %4 {offsets = [0, 9], sizes = [4, 2048], strides = [1, 1]} : vector<4x2176xbf16> to vector<4x2048xbf16>
    %15 = vector.extract_strided_slice %4 {offsets = [0, 10], sizes = [4, 2048], strides = [1, 1]} : vector<4x2176xbf16> to vector<4x2048xbf16>
    %16 = vector.extract_strided_slice %4 {offsets = [0, 11], sizes = [4, 2048], strides = [1, 1]} : vector<4x2176xbf16> to vector<4x2048xbf16>
    %17 = vector.extract_strided_slice %4 {offsets = [0, 12], sizes = [4, 2048], strides = [1, 1]} : vector<4x2176xbf16> to vector<4x2048xbf16>
    %18 = vector.extract_strided_slice %4 {offsets = [0, 13], sizes = [4, 2048], strides = [1, 1]} : vector<4x2176xbf16> to vector<4x2048xbf16>
    %19 = vector.extract_strided_slice %4 {offsets = [0, 14], sizes = [4, 2048], strides = [1, 1]} : vector<4x2176xbf16> to vector<4x2048xbf16>
    %20 = vector.extract_strided_slice %4 {offsets = [0, 15], sizes = [4, 2048], strides = [1, 1]} : vector<4x2176xbf16> to vector<4x2048xbf16>
    %21 = vector.extract_strided_slice %4 {offsets = [0, 16], sizes = [4, 2048], strides = [1, 1]} : vector<4x2176xbf16> to vector<4x2048xbf16>
    %22 = vector.extract_strided_slice %4 {offsets = [0, 17], sizes = [4, 2048], strides = [1, 1]} : vector<4x2176xbf16> to vector<4x2048xbf16>
    %23 = vector.extract_strided_slice %4 {offsets = [0, 18], sizes = [4, 2048], strides = [1, 1]} : vector<4x2176xbf16> to vector<4x2048xbf16>
    %24 = vector.extract_strided_slice %4 {offsets = [0, 19], sizes = [4, 2048], strides = [1, 1]} : vector<4x2176xbf16> to vector<4x2048xbf16>
    %25 = vector.extract_strided_slice %4 {offsets = [0, 20], sizes = [4, 2048], strides = [1, 1]} : vector<4x2176xbf16> to vector<4x2048xbf16>
    %26 = tpu.concatenate %5, %6, %7, %8, %9, %10, %11, %12, %13, %14, %15, %16, %17, %18, %19, %20 in 0 : vector<4x2048xbf16>, vector<4x2048xbf16>, vector<4x2048xbf16>, vector<4x2048xbf16>, vector<4x2048xbf16>, vector<4x2048xbf16>, vector<4x2048xbf16>, vector<4x2048xbf16>, vector<4x2048xbf16>, vector<4x2048xbf16>, vector<4x2048xbf16>, vector<4x2048xbf16>, vector<4x2048xbf16>, vector<4x2048xbf16>, vector<4x2048xbf16>, vector<4x2048xbf16> -> vector<64x2048xbf16>
    %27 = tpu.concatenate %21, %22, %23, %24, %25 in 0 : vector<4x2048xbf16>, vector<4x2048xbf16>, vector<4x2048xbf16>, vector<4x2048xbf16>, vector<4x2048xbf16> -> vector<20x2048xbf16>
    %28 = tpu.concatenate %26, %27 in 0 : vector<64x2048xbf16>, vector<20x2048xbf16> -> vector<84x2048xbf16>
    %c0_5 = arith.constant 0 : index
    %c0_6 = arith.constant 0 : index
    %29 = vector.load %arg4[%c0_5, %c0_6] : memref<64x84xbf16, #tpu.memory_space<vmem>>, vector<64x84xbf16>
    %cst = arith.constant dense<0.000000e+00> : vector<64x2048xf32>
    %30 = tpu.matmul %29, %28, %cst {dimension_numbers = #tpu.dot_dimension_numbers<[1], [0], [0], [1], [0, 0, 1, 1], [], []>} : vector<64x84xbf16>, vector<84x2048xbf16>, vector<64x2048xf32> -> vector<64x2048xf32>
    %c0_7 = arith.constant 0 : index
    %c0_8 = arith.constant 0 : index
    %31 = vector.load %arg5[%c0_7, %c0_8] : memref<64x1xf32, #tpu.memory_space<vmem>>, vector<64x1xf32>
    %32 = vector.broadcast %31 : vector<64x1xf32> to vector<64x2048xf32>
    %33 = arith.addf %30, %32 : vector<64x2048xf32>
    %cst_9 = arith.constant 0.000000e+00 : f32
    %34 = vector.broadcast %cst_9 : f32 to vector<64x2048xf32>
    %35 = arith.maximumf %33, %34 : vector<64x2048xf32>
    %c0_10 = arith.constant 0 : index
    %c0_11 = arith.constant 0 : index
    %c0_12 = arith.constant 0 : index
    %36 = vector.load %arg6[%c0_10, %c0_11, %c0_12] : memref<1x64x2048xf32, #tpu.memory_space<vmem>>, vector<1x64x2048xf32>
    %37 = vector.shape_cast %36 : vector<1x64x2048xf32> to vector<64x2048xf32>
    %38 = vector.shape_cast %35 : vector<64x2048xf32> to vector<1x64x2048xf32>
    tpu.vector_store %arg6[%c0_10, %c0_11, %c0_12], %38 {strides = array<i32>} : memref<1x64x2048xf32, #tpu.memory_space<vmem>>, vector<1x64x2048xf32>,
    return
  }
  func.func @transform_0(%arg0: i32, %arg1: i32) -> (i32, i32, i32) {
    %c0_i32 = arith.constant 0 : i32
    %c0_i32_0 = arith.constant 0 : i32
    return %arg0, %c0_i32, %arg1 : i32, i32, i32
  }
  func.func @transform_1(%arg0: i32, %arg1: i32) -> (i32, i32, i32) {
    %c1_i32 = arith.constant 1 : i32
    %0 = arith.addi %arg1, %c1_i32 : i32
    %c16_i32 = arith.constant 16 : i32
    %1 = arith.muli %0, %c16_i32 : i32
    %c0_i32 = arith.constant 0 : i32
    %c0_i32_0 = arith.constant 0 : i32
    return %arg0, %c0_i32, %1 : i32, i32, i32
  }
  func.func @transform_2(%arg0: i32, %arg1: i32) -> (i32, i32) {
    %c0_i32 = arith.constant 0 : i32
    %c0_i32_0 = arith.constant 0 : i32
    %c0_i32_1 = arith.constant 0 : i32
    return %c0_i32, %c0_i32_0 : i32, i32
  }
  func.func @transform_3(%arg0: i32, %arg1: i32) -> (i32, i32) {
    %c0_i32 = arith.constant 0 : i32
    %c0_i32_0 = arith.constant 0 : i32
    %c0_i32_1 = arith.constant 0 : i32
    return %c0_i32, %c0_i32_0 : i32, i32
  }
  func.func @transform_4(%arg0: i32, %arg1: i32) -> (i32, i32, i32) {
    %c0_i32 = arith.constant 0 : i32
    %c0_i32_0 = arith.constant 0 : i32
    return %arg0, %c0_i32, %arg1 : i32, i32, i32
  }
}

</mosaic_0001>

<llo_original>
// kernel: tpu_custom_call.1
$region0: #{tpu_custom_call.1}
  #allocation0 [shape = 'u32[]', space=smem, size = 0x4, offset = 0x4, fixed_abs, tag = 'smem constant byte address 0x4 - core index']
  #allocation1 [shape = 'u32[144,128]{1,0:T(1,128)}', space=vmem, size = 0x12000, scoped, tag = 'internal scratch']
  %s0 = inlined_call_operand.hbm [shape: bf16[2,4,2176], index: 0, kind: input, shape index: {}]
  %s1 = inlined_call_operand.vmem [shape: bf16[2,4,2176], index: 1, kind: input, shape index: {}]
  %s2 = inlined_call_operand.hbm [shape: bf16[64,84], index: 2, kind: input, shape index: {}]
  %s3 = inlined_call_operand.vmem [shape: f32[64,1], index: 3, kind: input, shape index: {}]
  %s4 = inlined_call_operand.hbm [shape: f32[2,64,2048], index: 4, kind: output, shape index: {}]
  %s5 = sld [smem:[#allocation0]]
  $region57: #{tpu_custom_call.1} parent=0
    _
  %s7 = ssub.s32 1, %s5
  %s8 = scalar_select 0, %s7, %s5
  $region1: #{tpu_custom_call.1} parent=0
    #allocation2 [shape = 'u8[32768]{0}', space=vmem, size = 0x8000, scoped, tag = 'input window, operand 0']
    #allocation3 [shape = 's32[2]{0}', space=sflag, size = 0x8, scoped, tag = 'scoped memory for tpu_custom_call.1']
    #allocation4 [shape = 's32[2]{0}', space=sflag, size = 0x8, scoped, tag = 'scoped memory for tpu_custom_call.1']
    #allocation5 [shape = 'u8[16384]{0}', space=vmem, size = 0x4000, scoped, tag = 'input window, operand 2, single buffered']
    #allocation6 [shape = 's32[1]{0}', space=sflag, size = 0x4, scoped, tag = 'scoped memory for tpu_custom_call.1']
    #allocation7 [shape = 'u8[1048576]{0}', space=vmem, size = 0x100000, scoped, tag = 'output window, operand 0']
    %9 = vsyncpa [#allocation3], 0
    %s10 = scalar_lea.sflag [#allocation3], 1
    %11 = vsyncpa %s10, 0
    %12 = vsyncpa [#allocation6], 0
    %13 = vsyncpa [#allocation4], 0
    %s14 = scalar_lea.sflag [#allocation4], 1
    %15 = vsyncpa %s14, 0
    loop: start=0, step=1, limit=4
    $region2: #{tpu_custom_call.1} parent=1 // loop_pre_header
      _
    $region3: #{tpu_custom_call.1} parent=1 // loop_header
      %s17 = sphi 0, %s21
      %p18 = scmp.ge.s32.totalorder %s17, 4
      %s24 = sphi 0, %s36
      %s25 = sphi 0, %s32
      %s26 = sphi 0, %s24
      %s27 = sphi 0, %s25
      %s28 = sphi 0, %s26
      %s29 = sphi 0, %s27
      %s41 = sphi 0, %s43
      %s44 = sphi 0, %s41
      %s45 = sphi 0, %s44
      %s61 = sphi 0, %s45
      %s73 = sphi 0, %s75
      %s76 = sphi 0, %s73
      %s77 = sphi 0, %s76
      %s93 = sphi 0, %s77
      %s97 = sphi 0, %s97
      %s99 = sphi 0, %s97
      %s100 = sphi 0, %s99
      %s114 = sphi 0, %s100
      %s118 = sphi 0, %s118
      %s120 = sphi 0, %s118
      %s121 = sphi 0, %s120
      %s135 = sphi 0, %s121
      %s143 = sphi 0, %s145
      %s146 = sphi 0, %s143
      %s147 = sphi 0, %s146
      %s163 = sphi 0, %s147
    $region4: #{tpu_custom_call.1} parent=1 // loop_header_branch
      %20 = sbr.rel (%p18) target = $region8
    $region5: #{tpu_custom_call.1} parent=1 // loop_body
      %s22 = ssub.s32 %s17, 1
      %s23 = ssub.s32 %s17, 2
      %s30 = sadd.s32 1, %s25
      %p31 = scmp.ge.s32.totalorder %s30, 1
      %s32 = scalar_select %p31, 0, %s30
      %s33 = sadd.s32 1, %s24
      %s34 = scalar_select %p31, %s33, %s24
      %p35 = scmp.ge.s32.totalorder %s34, 2
      %s36 = scalar_select %p35, 0, %s34
      %s37 = ssub.s32 %s24, %s36
      %s38 = ssub.s32 %s25, %s32
      %s39 = sor.u32 %s37, %s38
      %p40 = scmp.eq.s32.totalorder %s39, 0
      %s42 = sadd.s32 %s41, 1
      %s43 = scalar_select %p40, %s41, %s42
      %p46 = pneg %p40
      %p47 = scmp.eq.s32.totalorder %s17, 1
      %p48 = por %p46, %p47
      %p49 = scmp.ne.s32.totalorder %s41, %s44
      %p50 = scmp.eq.s32.totalorder %s17, 0
      %p51 = por %p49, %p50
      %p52 = scmp.ne.s32.totalorder %s41, %s44
      %p53 = scmp.eq.s32.totalorder %s22, 1
      %p54 = por %p52, %p53
      %p55 = scmp.ne.s32.totalorder %s44, %s45
      %p56 = scmp.eq.s32.totalorder %s22, 0
      %p57 = por %p55, %p56
      %p58 = scmp.ne.s32.totalorder %s44, %s45
      %p59 = scmp.eq.s32.totalorder %s23, 1
      %p60 = por %p58, %p59
      %p62 = scmp.ne.s32.totalorder %s45, %s61
      %p63 = scmp.eq.s32.totalorder %s23, 0
      %p64 = por %p62, %p63
      %s65 = sadd.s32 %s25, 1
      %s66 = smul.u32 %s65, 16
      %s67 = sadd.s32 %s32, 1
      %s68 = smul.u32 %s67, 16
      %s69 = ssub.s32 %s24, %s36
      %s70 = ssub.s32 %s66, %s68
      %s71 = sor.u32 %s69, %s70
      %p72 = scmp.eq.s32.totalorder %s71, 0
      %s74 = sadd.s32 %s73, 1
      %s75 = scalar_select %p72, %s73, %s74
      %p78 = pneg %p72
      %p79 = scmp.eq.s32.totalorder %s17, 1
      %p80 = por %p78, %p79
      %p81 = scmp.ne.s32.totalorder %s73, %s76
      %p82 = scmp.eq.s32.totalorder %s17, 0
      %p83 = por %p81, %p82
      %p84 = scmp.ne.s32.totalorder %s73, %s76
      %p85 = scmp.eq.s32.totalorder %s22, 1
      %p86 = por %p84, %p85
      %p87 = scmp.ne.s32.totalorder %s76, %s77
      %p88 = scmp.eq.s32.totalorder %s22, 0
      %p89 = por %p87, %p88
      %p90 = scmp.ne.s32.totalorder %s76, %s77
      %p91 = scmp.eq.s32.totalorder %s23, 1
      %p92 = por %p90, %p91
      %p94 = scmp.ne.s32.totalorder %s77, %s93
      %p95 = scmp.eq.s32.totalorder %s23, 0
      %p96 = por %p94, %p95
      %s98 = sadd.s32 %s97, 1
      %p101 = scmp.eq.s32.totalorder %s17, 1
      %p102 = scmp.ne.s32.totalorder %s97, %s99
      %p103 = scmp.eq.s32.totalorder %s17, 0
      %p104 = por %p102, %p103
      %p105 = scmp.ne.s32.totalorder %s97, %s99
      %p106 = scmp.eq.s32.totalorder %s22, 1
      %p107 = por %p105, %p106
      %p108 = scmp.ne.s32.totalorder %s99, %s100
      %p109 = scmp.eq.s32.totalorder %s22, 0
      %p110 = por %p108, %p109
      %p111 = scmp.ne.s32.totalorder %s99, %s100
      %p112 = scmp.eq.s32.totalorder %s23, 1
      %p113 = por %p111, %p112
      %p115 = scmp.ne.s32.totalorder %s100, %s114
      %p116 = scmp.eq.s32.totalorder %s23, 0
      %p117 = por %p115, %p116
      %s119 = sadd.s32 %s118, 1
      %p122 = scmp.eq.s32.totalorder %s17, 1
      %p123 = scmp.ne.s32.totalorder %s118, %s120
      %p124 = scmp.eq.s32.totalorder %s17, 0
      %p125 = por %p123, %p124
      %p126 = scmp.ne.s32.totalorder %s118, %s120
      %p127 = scmp.eq.s32.totalorder %s22, 1
      %p128 = por %p126, %p127
      %p129 = scmp.ne.s32.totalorder %s120, %s121
      %p130 = scmp.eq.s32.totalorder %s22, 0
      %p131 = por %p129, %p130
      %p132 = scmp.ne.s32.totalorder %s120, %s121
      %p133 = scmp.eq.s32.totalorder %s23, 1
      %p134 = por %p132, %p133
      %p136 = scmp.ne.s32.totalorder %s121, %s135
      %p137 = scmp.eq.s32.totalorder %s23, 0
      %p138 = por %p136, %p137
      %s139 = ssub.s32 %s24, %s36
      %s140 = ssub.s32 %s25, %s32
      %s141 = sor.u32 %s139, %s140
      %p142 = scmp.eq.s32.totalorder %s141, 0
      %s144 = sadd.s32 %s143, 1
      %s145 = scalar_select %p142, %s143, %s144
      %p148 = pneg %p142
      %p149 = scmp.eq.s32.totalorder %s17, 1
      %p150 = por %p148, %p149
      %p151 = scmp.ne.s32.totalorder %s143, %s146
      %p152 = scmp.eq.s32.totalorder %s17, 0
      %p153 = por %p151, %p152
      %p154 = scmp.ne.s32.totalorder %s143, %s146
      %p155 = scmp.eq.s32.totalorder %s22, 1
      %p156 = por %p154, %p155
      %p157 = scmp.ne.s32.totalorder %s146, %s147
      %p158 = scmp.eq.s32.totalorder %s22, 0
      %p159 = por %p157, %p158
      %p160 = scmp.ne.s32.totalorder %s146, %s147
      %p161 = scmp.eq.s32.totalorder %s23, 1
      %p162 = por %p160, %p161
      %p164 = scmp.ne.s32.totalorder %s147, %s163
      %p165 = scmp.eq.s32.totalorder %s23, 0
      %p166 = por %p164, %p165
      %p167 = scmp.le.s32.totalorder 1, %s17
      %p168 = scmp.lt.s32.totalorder %s17, 3
      %p169 = pnand %p167, %p168
      %p170 = pneg %p169
      // Predicated region
      $region9: #{tpu_custom_call.1} parent=5 // pred_check
        _
      $region10: #{tpu_custom_call.1} parent=5 // pred_check_branch
        %172 = sbr.rel (%p169) target = $region12
      $region11: #{tpu_custom_call.1} parent=5 // pred_region
        %s173 = ssub.s32 %s17, 1
        // Predicated region
        $region13: #{tpu_custom_call.1} parent=11 // pred_check
          %p174 = pneg %p110
        $region14: #{tpu_custom_call.1} parent=11 // pred_check_branch
          %176 = sbr.rel (%p174) target = $region16
        $region15: #{tpu_custom_call.1} parent=11 // pred_region
          %s178 = ssub.s32 512, 512
          %179 = vsyncadd [#allocation6], %s178
          %s180 = sshll.u32 [#allocation5], 4
          %s181 = int_to_ptr.vmem [resolvable:$true] %s180
          %186 = dma.hbm_to_vmem [thread:$0]  %s2, 512, %s181, [#allocation6], 64, 64, 4
        $region16: #{tpu_custom_call.1} parent=11 // pred_fallthru
          _
        // Predicated region
        $region17: #{tpu_custom_call.1} parent=11 // pred_check
          %p187 = pneg %p131
        $region18: #{tpu_custom_call.1} parent=11 // pred_check_branch
          %189 = sbr.rel (%p187) target = $region20
        $region19: #{tpu_custom_call.1} parent=11 // pred_region
          _
        $region20: #{tpu_custom_call.1} parent=11 // pred_fallthru
          _
      $region12: #{tpu_custom_call.1} parent=5 // pred_fallthru
        _
      %p190 = scmp.lt.s32.totalorder %s17, 2
      // Predicated region
      $region21: #{tpu_custom_call.1} parent=5 // pred_check
        %p191 = pneg %p190
      $region22: #{tpu_custom_call.1} parent=5 // pred_check_branch
        %193 = sbr.rel (%p191) target = $region24
      $region23: #{tpu_custom_call.1} parent=5 // pred_region
        // Predicated region
        $region25: #{tpu_custom_call.1} parent=23 // pred_check
          %p194 = pneg %p51
        $region26: #{tpu_custom_call.1} parent=23 // pred_check_branch
          %196 = sbr.rel (%p194) target = $region28
        $region27: #{tpu_custom_call.1} parent=23 // pred_region
          %s197 = sand.u32 %s41, 1
          %s198 = scalar_lea.sflag [#allocation3], %s197
          %s199 = sand.u32 %s41, 1
          %s200 = smul.addr %s199, 32
          %s201 = scalar_lea.vmem [#allocation2], %s200
          %s202 = smul.u32 16, %s25
          %s203 = ssub.s32 17, %s202
          %p204 = scmp.lt.s32.totalorder %s203, 16
          %s205 = scalar_select %p204, %s203, 16
          %s206 = smul.u32 32, %s205
          %s208 = ssub.s32 512, %s206
          %209 = vsyncadd %s198, %s208
          %p210 = scmp.ne.s32.totalorder 0, %s206
          %s211 = smul.addr %s24, 17
          %s212 = sadd.s32 %s202, %s211
          %s213 = smul.addr %s212, 32
          %s214 = scalar_lea.hbm %s0, %s213
          %s215 = smul.u32 %s205, 2
          %s216 = sshll.u32 %s215, 4
          %s217 = sshll.u32 %s201, 4
          %s218 = int_to_ptr.vmem [resolvable:$true] %s217
          %220 = dma.hbm_to_vmem [thread:$0]  (%p210), %s214, %s216, %s218, %s198
        $region28: #{tpu_custom_call.1} parent=23 // pred_fallthru
          _
        // Predicated region
        $region29: #{tpu_custom_call.1} parent=23 // pred_check
          %p221 = pneg %p83
        $region30: #{tpu_custom_call.1} parent=23 // pred_check_branch
          %223 = sbr.rel (%p221) target = $region32
        $region31: #{tpu_custom_call.1} parent=23 // pred_region
          %s224 = sadd.s32 %s25, 1
          %s225 = smul.u32 %s224, 16
          %p226 = scmp.lt.s32.totalorder %s24, 1
          %s227 = scalar_select %p226, %s24, 1
          %p228 = scmp.lt.s32.totalorder %s225, 16
          %s229 = scalar_select %p228, %s225, 16
          %s230 = smul.addr %s227, 17
          %s231 = sadd.s32 %s229, %s230
          %s232 = smul.addr %s231, 2
          %s233 = scalar_lea.vmem %s1, %s232
          %s234 = sadd.s32 %s25, 1
          %s235 = smul.u32 %s234, 16
        $region32: #{tpu_custom_call.1} parent=23 // pred_fallthru
          _
      $region24: #{tpu_custom_call.1} parent=5 // pred_fallthru
        _
      %p236 = scmp.le.s32.totalorder 1, %s17
      %p237 = scmp.lt.s32.totalorder %s17, 3
      %p238 = pnand %p236, %p237
      %p239 = pneg %p238
      // Predicated region
      $region33: #{tpu_custom_call.1} parent=5 // pred_check
        _
      $region34: #{tpu_custom_call.1} parent=5 // pred_check_branch
        %241 = sbr.rel (%p238) target = $region36
      $region35: #{tpu_custom_call.1} parent=5 // pred_region
        %s242 = ssub.s32 %s17, 1
        %s243 = sand.u32 %s44, 1
        %s244 = scalar_lea.sflag [#allocation3], %s243
        %s245 = sand.u32 %s44, 1
        %s246 = smul.addr %s245, 32
        %s247 = scalar_lea.vmem [#allocation2], %s246
        // Predicated region
        $region37: #{tpu_custom_call.1} parent=35 // pred_check
          %p248 = pneg %p57
        $region38: #{tpu_custom_call.1} parent=35 // pred_check_branch
          %250 = sbr.rel (%p248) target = $region40
        $region39: #{tpu_custom_call.1} parent=35 // pred_region
          %251 = dma.done %s244, 512
        $region40: #{tpu_custom_call.1} parent=35 // pred_fallthru
          _
        // Predicated region
        $region41: #{tpu_custom_call.1} parent=35 // pred_check
          %p252 = pneg %p110
        $region42: #{tpu_custom_call.1} parent=35 // pred_check_branch
          %254 = sbr.rel (%p252) target = $region44
        $region43: #{tpu_custom_call.1} parent=35 // pred_region
          %255 = dma.done [#allocation6], 512
        $region44: #{tpu_custom_call.1} parent=35 // pred_fallthru
          _
        %s256 = sand.u32 %s44, 1
        %s257 = scalar_lea.sflag [#allocation3], %s256
        %s258 = sand.u32 %s44, 1
        %s259 = smul.addr %s258, 32
        %s260 = scalar_lea.vmem [#allocation2], %s259
        %p261 = pneg %p57
        %p262 = pneg %p54
        %s263 = sadd.s32 %s27, 1
        %s264 = smul.u32 %s263, 16
        %p265 = scmp.lt.s32.totalorder %s26, 1
        %s266 = scalar_select %p265, %s26, 1
        %p267 = scmp.lt.s32.totalorder %s264, 16
        %s268 = scalar_select %p267, %s264, 16
        %s269 = smul.addr %s266, 17
        %s270 = sadd.s32 %s268, %s269
        %s271 = smul.addr %s270, 2
        %s272 = scalar_lea.vmem %s1, %s271
        %p273 = pneg %p89
        %p274 = pneg %p86
        %p275 = pneg %p110
        %p276 = pneg %p107
        %p277 = pneg %p131
        %p278 = pneg %p128
        %p279 = pneg %p159
        %p280 = pneg %p156
        %s281 = sand.u32 %s146, 1
        %s282 = scalar_lea.sflag [#allocation4], %s281
        %s283 = sand.u32 %s146, 1
        %s284 = smul.addr %s283, 1024
        %s285 = scalar_lea.vmem [#allocation7], %s284
        %s286 = smul.u32 16, %s27
        %s287 = ssub.s32 17, %s286
        %p288 = scmp.lt.s32.totalorder %s287, 16
        %s289 = scalar_select %p288, %s287, 16
        %s290 = smul.u32 32, %s289
        %s291 = sadd.s32 %s27, 1
        %s292 = smul.u32 %s291, 16
        %p293 = scmp.lt.s32.totalorder %s26, 1
        %s294 = scalar_select %p293, %s26, 1
        %p295 = scmp.lt.s32.totalorder %s292, 16
        %s296 = scalar_select %p295, %s292, 16
        %s297 = smul.addr %s294, 17
        %s298 = sadd.s32 %s296, %s297
        %s299 = smul.addr %s298, 2
        %s300 = scalar_lea.vmem %s1, %s299
        %s301 = sadd.s32 %s27, 1
        %s302 = smul.u32 %s301, 16
        %s303 = smul.u32 16, %s27
        %v305 = vld [vmem:[%s247] sm:$0xff]
        %v306 = vld [vmem:[%s247 + $0x8] sm:$0xff]
        %v307 = vld [vmem:[%s247 + $0x10] sm:$0xff]
        %v308 = vld [vmem:[%s247 + $0x18] sm:$0xff]
        %v309 = vld [vmem:[%s300] sm:$0x3]
        %v314 = vcombine.high %v305, %v305
        %v316 = vunpack.c.l.s4 1983009808
        %v317 = vunpack.c.0.s8 %v316
        %v318 = vlaneseq
        %v319 = vshrl.u32 %v318, 7
        %v320 = vsub.s32 %v317, %v319
        %v321 = vrot.slane %v305, %v320
        %v323 = vunpack.c.l.s4 1983009808
        %v324 = vunpack.c.0.s8 %v323
        %v325 = vlaneseq
        %v326 = vshrl.u32 %v325, 7
        %v327 = vsub.s32 %v324, %v326
        %v328 = vrot.slane %v314, %v327
        %v329 = vcombine.high %v321, %v321
        %v330 = vcombine.high %v328, %v328
        %v331 = vcombine.high %v306, %v306
        %v333 = vunpack.c.l.s4 1983009808
        %v334 = vunpack.c.0.s8 %v333
        %v335 = vlaneseq
        %v336 = vshrl.u32 %v335, 7
        %v337 = vsub.s32 %v334, %v336
        %v338 = vrot.slane %v306, %v337
        %v340 = vunpack.c.l.s4 1983009808
        %v341 = vunpack.c.0.s8 %v340
        %v342 = vlaneseq
        %v343 = vshrl.u32 %v342, 7
        %v344 = vsub.s32 %v341, %v343
        %v345 = vrot.slane %v331, %v344
        %v346 = vcombine.high %v338, %v338
        %v347 = vcombine.high %v345, %v345
        %v348 = vcombine.high %v307, %v307
        %v350 = vunpack.c.l.s4 1983009808
        %v351 = vunpack.c.0.s8 %v350
        %v352 = vlaneseq
        %v353 = vshrl.u32 %v352, 7
        %v354 = vsub.s32 %v351, %v353
        %v355 = vrot.slane %v307, %v354
        %v357 = vunpack.c.l.s4 1983009808
        %v358 = vunpack.c.0.s8 %v357
        %v359 = vlaneseq
        %v360 = vshrl.u32 %v359, 7
        %v361 = vsub.s32 %v358, %v360
        %v362 = vrot.slane %v348, %v361
        %v363 = vcombine.high %v355, %v355
        %v364 = vcombine.high %v362, %v362
        %v365 = vcombine.high %v308, %v308
        %v367 = vunpack.c.l.s4 1983009808
        %v368 = vunpack.c.0.s8 %v367
        %v369 = vlaneseq
        %v370 = vshrl.u32 %v369, 7
        %v371 = vsub.s32 %v368, %v370
        %v372 = vrot.slane %v308, %v371
        %v374 = vunpack.c.l.s4 1983009808
        %v375 = vunpack.c.0.s8 %v374
        %v376 = vlaneseq
        %v377 = vshrl.u32 %v376, 7
        %v378 = vsub.s32 %v375, %v377
        %v379 = vrot.slane %v365, %v378
        %v380 = vcombine.high %v372, %v372
        %v381 = vcombine.high %v379, %v379
        %v383 = vrot.slane %v321, 6
        %v384 = vrot.slane %v329, 6
        %v385 = vrot.slane %v328, 6
        %v386 = vrot.slane %v330, 6
        %v387 = vrot.slane %v338, 6
        %v388 = vrot.slane %v346, 6
        %v389 = vrot.slane %v345, 6
        %v390 = vrot.slane %v347, 6
        %v391 = vrot.slane %v355, 6
        %v392 = vrot.slane %v363, 6
        %v393 = vrot.slane %v362, 6
        %v394 = vrot.slane %v364, 6
        %v395 = vrot.slane %v372, 6
        %v396 = vrot.slane %v380, 6
        %v397 = vrot.slane %v379, 6
        %v398 = vrot.slane %v381, 6
        %v399 = vrot.slane %v309, 6
        %400 = vrot.lane.b32.xlu0 %v383, 127
        %v401 = vpop.permute.xlu0 %400
        %402 = vrot.lane.b32.xlu0 %v384, 127
        %v403 = vpop.permute.xlu0 %402
        %404 = vrot.lane.b32.xlu0 %v385, 127
        %v405 = vpop.permute.xlu0 %404
        %406 = vrot.lane.b32.xlu0 %v386, 127
        %v407 = vpop.permute.xlu0 %406
        %408 = vrot.lane.b32.xlu0 %v387, 127
        %v409 = vpop.permute.xlu0 %408
        %410 = vrot.lane.b32.xlu0 %v388, 127
        %v411 = vpop.permute.xlu0 %410
        %412 = vrot.lane.b32.xlu0 %v389, 127
        %v413 = vpop.permute.xlu0 %412
        %414 = vrot.lane.b32.xlu0 %v390, 127
        %v415 = vpop.permute.xlu0 %414
        %416 = vrot.lane.b32.xlu0 %v391, 127
        %v417 = vpop.permute.xlu0 %416
        %418 = vrot.lane.b32.xlu0 %v392, 127
        %v419 = vpop.permute.xlu0 %418
        %420 = vrot.lane.b32.xlu0 %v393, 127
        %v421 = vpop.permute.xlu0 %420
        %422 = vrot.lane.b32.xlu0 %v394, 127
        %v423 = vpop.permute.xlu0 %422
        %424 = vrot.lane.b32.xlu0 %v395, 127
        %v425 = vpop.permute.xlu0 %424
        %426 = vrot.lane.b32.xlu0 %v396, 127
        %v427 = vpop.permute.xlu0 %426
        %428 = vrot.lane.b32.xlu0 %v397, 127
        %v429 = vpop.permute.xlu0 %428
        %430 = vrot.lane.b32.xlu0 %v398, 127
        %v431 = vpop.permute.xlu0 %430
        %432 = vrot.lane.b32.xlu0 %v399, 127
        %v433 = vpop.permute.xlu0 %432
        %vm434 = vcmask 1039360
        %v435 = vsel %vm434, %v401, %v403
        %v436 = vsel %vm434, %v403, %v405
        %v437 = vsel %vm434, %v405, %v407
        %v438 = vsel %vm434, %v407, %v409
        %v439 = vsel %vm434, %v409, %v411
        %v440 = vsel %vm434, %v411, %v413
        %v441 = vsel %vm434, %v413, %v415
        %v442 = vsel %vm434, %v415, %v417
        %v443 = vsel %vm434, %v417, %v419
        %v444 = vsel %vm434, %v419, %v421
        %v445 = vsel %vm434, %v421, %v423
        %v446 = vsel %vm434, %v423, %v425
        %v447 = vsel %vm434, %v425, %v427
        %v448 = vsel %vm434, %v427, %v429
        %v449 = vsel %vm434, %v429, %v431
        %v450 = vsel %vm434, %v431, %v433
        %v451 = vrot.slane %v321, 4
        %v452 = vrot.slane %v329, 4
        %v453 = vrot.slane %v328, 4
        %v454 = vrot.slane %v330, 4
        %v455 = vrot.slane %v338, 4
        %v456 = vrot.slane %v346, 4
        %v457 = vrot.slane %v345, 4
        %v458 = vrot.slane %v347, 4
        %v459 = vrot.slane %v355, 4
        %v460 = vrot.slane %v363, 4
        %v461 = vrot.slane %v362, 4
        %v462 = vrot.slane %v364, 4
        %v463 = vrot.slane %v372, 4
        %v464 = vrot.slane %v380, 4
        %v465 = vrot.slane %v379, 4
        %v466 = vrot.slane %v381, 4
        %v467 = vrot.slane %v309, 4
        %468 = vrot.lane.b32.xlu0 %v451, 126
        %v469 = vpop.permute.xlu0 %468
        %470 = vrot.lane.b32.xlu0 %v452, 126
        %v471 = vpop.permute.xlu0 %470
        %472 = vrot.lane.b32.xlu0 %v453, 126
        %v473 = vpop.permute.xlu0 %472
        %474 = vrot.lane.b32.xlu0 %v454, 126
        %v475 = vpop.permute.xlu0 %474
        %476 = vrot.lane.b32.xlu0 %v455, 126
        %v477 = vpop.permute.xlu0 %476
        %478 = vrot.lane.b32.xlu0 %v456, 126
        %v479 = vpop.permute.xlu0 %478
        %480 = vrot.lane.b32.xlu0 %v457, 126
        %v481 = vpop.permute.xlu0 %480
        %482 = vrot.lane.b32.xlu0 %v458, 126
        %v483 = vpop.permute.xlu0 %482
        %484 = vrot.lane.b32.xlu0 %v459, 126
        %v485 = vpop.permute.xlu0 %484
        %486 = vrot.lane.b32.xlu0 %v460, 126
        %v487 = vpop.permute.xlu0 %486
        %488 = vrot.lane.b32.xlu0 %v461, 126
        %v489 = vpop.permute.xlu0 %488
        %490 = vrot.lane.b32.xlu0 %v462, 126
        %v491 = vpop.permute.xlu0 %490
        %492 = vrot.lane.b32.xlu0 %v463, 126
        %v493 = vpop.permute.xlu0 %492
        %494 = vrot.lane.b32.xlu0 %v464, 126
        %v495 = vpop.permute.xlu0 %494
        %496 = vrot.lane.b32.xlu0 %v465, 126
        %v497 = vpop.permute.xlu0 %496
        %498 = vrot.lane.b32.xlu0 %v466, 126
        %v499 = vpop.permute.xlu0 %498
        %500 = vrot.lane.b32.xlu0 %v467, 126
        %v501 = vpop.permute.xlu0 %500
        %vm502 = vcmask 1031168
        %v503 = vsel %vm502, %v469, %v471
        %v504 = vsel %vm502, %v471, %v473
        %v505 = vsel %vm502, %v473, %v475
        %v506 = vsel %vm502, %v475, %v477
        %v507 = vsel %vm502, %v477, %v479
        %v508 = vsel %vm502, %v479, %v481
        %v509 = vsel %vm502, %v481, %v483
        %v510 = vsel %vm502, %v483, %v485
        %v511 = vsel %vm502, %v485, %v487
        %v512 = vsel %vm502, %v487, %v489
        %v513 = vsel %vm502, %v489, %v491
        %v514 = vsel %vm502, %v491, %v493
        %v515 = vsel %vm502, %v493, %v495
        %v516 = vsel %vm502, %v495, %v497
        %v517 = vsel %vm502, %v497, %v499
        %v518 = vsel %vm502, %v499, %v501
        %v519 = vrot.slane %v321, 2
        %v520 = vrot.slane %v329, 2
        %v521 = vrot.slane %v328, 2
        %v522 = vrot.slane %v330, 2
        %v523 = vrot.slane %v338, 2
        %v524 = vrot.slane %v346, 2
        %v525 = vrot.slane %v345, 2
        %v526 = vrot.slane %v347, 2
        %v527 = vrot.slane %v355, 2
        %v528 = vrot.slane %v363, 2
        %v529 = vrot.slane %v362, 2
        %v530 = vrot.slane %v364, 2
        %v531 = vrot.slane %v372, 2
        %v532 = vrot.slane %v380, 2
        %v533 = vrot.slane %v379, 2
        %v534 = vrot.slane %v381, 2
        %v535 = vrot.slane %v309, 2
        %536 = vrot.lane.b32.xlu0 %v519, 125
        %v537 = vpop.permute.xlu0 %536
        %538 = vrot.lane.b32.xlu0 %v520, 125
        %v539 = vpop.permute.xlu0 %538
        %540 = vrot.lane.b32.xlu0 %v521, 125
        %v541 = vpop.permute.xlu0 %540
        %542 = vrot.lane.b32.xlu0 %v522, 125
        %v543 = vpop.permute.xlu0 %542
        %544 = vrot.lane.b32.xlu0 %v523, 125
        %v545 = vpop.permute.xlu0 %544
        %546 = vrot.lane.b32.xlu0 %v524, 125
        %v547 = vpop.permute.xlu0 %546
        %548 = vrot.lane.b32.xlu0 %v525, 125
        %v549 = vpop.permute.xlu0 %548
        %550 = vrot.lane.b32.xlu0 %v526, 125
        %v551 = vpop.permute.xlu0 %550
        %552 = vrot.lane.b32.xlu0 %v527, 125
        %v553 = vpop.permute.xlu0 %552
        %554 = vrot.lane.b32.xlu0 %v528, 125
        %v555 = vpop.permute.xlu0 %554
        %556 = vrot.lane.b32.xlu0 %v529, 125
        %v557 = vpop.permute.xlu0 %556
        %558 = vrot.lane.b32.xlu0 %v530, 125
        %v559 = vpop.permute.xlu0 %558
        %560 = vrot.lane.b32.xlu0 %v531, 125
        %v561 = vpop.permute.xlu0 %560
        %562 = vrot.lane.b32.xlu0 %v532, 125
        %v563 = vpop.permute.xlu0 %562
        %564 = vrot.lane.b32.xlu0 %v533, 125
        %v565 = vpop.permute.xlu0 %564
        %566 = vrot.lane.b32.xlu0 %v534, 125
        %v567 = vpop.permute.xlu0 %566
        %568 = vrot.lane.b32.xlu0 %v535, 125
        %v569 = vpop.permute.xlu0 %568
        %vm570 = vcmask 1022976
        %v571 = vsel %vm570, %v537, %v539
        %v572 = vsel %vm570, %v539, %v541
        %v573 = vsel %vm570, %v541, %v543
        %v574 = vsel %vm570, %v543, %v545
        %v575 = vsel %vm570, %v545, %v547
        %v576 = vsel %vm570, %v547, %v549
        %v577 = vsel %vm570, %v549, %v551
        %v578 = vsel %vm570, %v551, %v553
        %v579 = vsel %vm570, %v553, %v555
        %v580 = vsel %vm570, %v555, %v557
        %v581 = vsel %vm570, %v557, %v559
        %v582 = vsel %vm570, %v559, %v561
        %v583 = vsel %vm570, %v561, %v563
        %v584 = vsel %vm570, %v563, %v565
        %v585 = vsel %vm570, %v565, %v567
        %v586 = vsel %vm570, %v567, %v569
        %587 = vrot.lane.b32.xlu0 %v321, 124
        %v588 = vpop.permute.xlu0 %587
        %589 = vrot.lane.b32.xlu0 %v329, 124
        %v590 = vpop.permute.xlu0 %589
        %591 = vrot.lane.b32.xlu0 %v328, 124
        %v592 = vpop.permute.xlu0 %591
        %593 = vrot.lane.b32.xlu0 %v330, 124
        %v594 = vpop.permute.xlu0 %593
        %595 = vrot.lane.b32.xlu0 %v338, 124
        %v596 = vpop.permute.xlu0 %595
        %597 = vrot.lane.b32.xlu0 %v346, 124
        %v598 = vpop.permute.xlu0 %597
        %599 = vrot.lane.b32.xlu0 %v345, 124
        %v600 = vpop.permute.xlu0 %599
        %601 = vrot.lane.b32.xlu0 %v347, 124
        %v602 = vpop.permute.xlu0 %601
        %603 = vrot.lane.b32.xlu0 %v355, 124
        %v604 = vpop.permute.xlu0 %603
        %605 = vrot.lane.b32.xlu0 %v363, 124
        %v606 = vpop.permute.xlu0 %605
        %607 = vrot.lane.b32.xlu0 %v362, 124
        %v608 = vpop.permute.xlu0 %607
        %609 = vrot.lane.b32.xlu0 %v364, 124
        %v610 = vpop.permute.xlu0 %609
        %611 = vrot.lane.b32.xlu0 %v372, 124
        %v612 = vpop.permute.xlu0 %611
        %613 = vrot.lane.b32.xlu0 %v380, 124
        %v614 = vpop.permute.xlu0 %613
        %615 = vrot.lane.b32.xlu0 %v379, 124
        %v616 = vpop.permute.xlu0 %615
        %617 = vrot.lane.b32.xlu0 %v381, 124
        %v618 = vpop.permute.xlu0 %617
        %619 = vrot.lane.b32.xlu0 %v309, 124
        %v620 = vpop.permute.xlu0 %619
        %vm621 = vcmask 1014784
        %v622 = vsel %vm621, %v588, %v590
        %v623 = vsel %vm621, %v590, %v592
        %v624 = vsel %vm621, %v592, %v594
        %v625 = vsel %vm621, %v594, %v596
        %v626 = vsel %vm621, %v596, %v598
        %v627 = vsel %vm621, %v598, %v600
        %v628 = vsel %vm621, %v600, %v602
        %v629 = vsel %vm621, %v602, %v604
        %v630 = vsel %vm621, %v604, %v606
        %v631 = vsel %vm621, %v606, %v608
        %v632 = vsel %vm621, %v608, %v610
        %v633 = vsel %vm621, %v610, %v612
        %v634 = vsel %vm621, %v612, %v614
        %v635 = vsel %vm621, %v614, %v616
        %v636 = vsel %vm621, %v616, %v618
        %v637 = vsel %vm621, %v618, %v620
        %638 = vrot.lane.b32.xlu0 %v383, 123
        %v639 = vpop.permute.xlu0 %638
        %640 = vrot.lane.b32.xlu0 %v384, 123
        %v641 = vpop.permute.xlu0 %640
        %642 = vrot.lane.b32.xlu0 %v385, 123
        %v643 = vpop.permute.xlu0 %642
        %644 = vrot.lane.b32.xlu0 %v386, 123
        %v645 = vpop.permute.xlu0 %644
        %646 = vrot.lane.b32.xlu0 %v387, 123
        %v647 = vpop.permute.xlu0 %646
        %648 = vrot.lane.b32.xlu0 %v388, 123
        %v649 = vpop.permute.xlu0 %648
        %650 = vrot.lane.b32.xlu0 %v389, 123
        %v651 = vpop.permute.xlu0 %650
        %652 = vrot.lane.b32.xlu0 %v390, 123
        %v653 = vpop.permute.xlu0 %652
        %654 = vrot.lane.b32.xlu0 %v391, 123
        %v655 = vpop.permute.xlu0 %654
        %656 = vrot.lane.b32.xlu0 %v392, 123
        %v657 = vpop.permute.xlu0 %656
        %658 = vrot.lane.b32.xlu0 %v393, 123
        %v659 = vpop.permute.xlu0 %658
        %660 = vrot.lane.b32.xlu0 %v394, 123
        %v661 = vpop.permute.xlu0 %660
        %662 = vrot.lane.b32.xlu0 %v395, 123
        %v663 = vpop.permute.xlu0 %662
        %664 = vrot.lane.b32.xlu0 %v396, 123
        %v665 = vpop.permute.xlu0 %664
        %666 = vrot.lane.b32.xlu0 %v397, 123
        %v667 = vpop.permute.xlu0 %666
        %668 = vrot.lane.b32.xlu0 %v398, 123
        %v669 = vpop.permute.xlu0 %668
        %670 = vrot.lane.b32.xlu0 %v399, 123
        %v671 = vpop.permute.xlu0 %670
        %vm672 = vcmask 1006592
        %v673 = vsel %vm672, %v639, %v641
        %v674 = vsel %vm672, %v641, %v643
        %v675 = vsel %vm672, %v643, %v645
        %v676 = vsel %vm672, %v645, %v647
        %v677 = vsel %vm672, %v647, %v649
        %v678 = vsel %vm672, %v649, %v651
        %v679 = vsel %vm672, %v651, %v653
        %v680 = vsel %vm672, %v653, %v655
        %v681 = vsel %vm672, %v655, %v657
        %v682 = vsel %vm672, %v657, %v659
        %v683 = vsel %vm672, %v659, %v661
        %v684 = vsel %vm672, %v661, %v663
        %v685 = vsel %vm672, %v663, %v665
        %v686 = vsel %vm672, %v665, %v667
        %v687 = vsel %vm672, %v667, %v669
        %v688 = vsel %vm672, %v669, %v671
        %689 = vrot.lane.b32.xlu0 %v451, 122
        %v690 = vpop.permute.xlu0 %689
        %691 = vrot.lane.b32.xlu0 %v452, 122
        %v692 = vpop.permute.xlu0 %691
        %693 = vrot.lane.b32.xlu0 %v453, 122
        %v694 = vpop.permute.xlu0 %693
        %695 = vrot.lane.b32.xlu0 %v454, 122
        %v696 = vpop.permute.xlu0 %695
        %697 = vrot.lane.b32.xlu0 %v455, 122
        %v698 = vpop.permute.xlu0 %697
        %699 = vrot.lane.b32.xlu0 %v456, 122
        %v700 = vpop.permute.xlu0 %699
        %701 = vrot.lane.b32.xlu0 %v457, 122
        %v702 = vpop.permute.xlu0 %701
        %703 = vrot.lane.b32.xlu0 %v458, 122
        %v704 = vpop.permute.xlu0 %703
        %705 = vrot.lane.b32.xlu0 %v459, 122
        %v706 = vpop.permute.xlu0 %705
        %707 = vrot.lane.b32.xlu0 %v460, 122
        %v708 = vpop.permute.xlu0 %707
        %709 = vrot.lane.b32.xlu0 %v461, 122
        %v710 = vpop.permute.xlu0 %709
        %711 = vrot.lane.b32.xlu0 %v462, 122
        %v712 = vpop.permute.xlu0 %711
        %713 = vrot.lane.b32.xlu0 %v463, 122
        %v714 = vpop.permute.xlu0 %713
        %715 = vrot.lane.b32.xlu0 %v464, 122
        %v716 = vpop.permute.xlu0 %715
        %717 = vrot.lane.b32.xlu0 %v465, 122
        %v718 = vpop.permute.xlu0 %717
        %719 = vrot.lane.b32.xlu0 %v466, 122
        %v720 = vpop.permute.xlu0 %719
        %721 = vrot.lane.b32.xlu0 %v467, 122
        %v722 = vpop.permute.xlu0 %721
        %vm723 = vcmask 998400
        %v724 = vsel %vm723, %v690, %v692
        %v725 = vsel %vm723, %v692, %v694
        %v726 = vsel %vm723, %v694, %v696
        %v727 = vsel %vm723, %v696, %v698
        %v728 = vsel %vm723, %v698, %v700
        %v729 = vsel %vm723, %v700, %v702
        %v730 = vsel %vm723, %v702, %v704
        %v731 = vsel %vm723, %v704, %v706
        %v732 = vsel %vm723, %v706, %v708
        %v733 = vsel %vm723, %v708, %v710
        %v734 = vsel %vm723, %v710, %v712
        %v735 = vsel %vm723, %v712, %v714
        %v736 = vsel %vm723, %v714, %v716
        %v737 = vsel %vm723, %v716, %v718
        %v738 = vsel %vm723, %v718, %v720
        %v739 = vsel %vm723, %v720, %v722
        %740 = vrot.lane.b32.xlu0 %v519, 121
        %v741 = vpop.permute.xlu0 %740
        %742 = vrot.lane.b32.xlu0 %v520, 121
        %v743 = vpop.permute.xlu0 %742
        %744 = vrot.lane.b32.xlu0 %v521, 121
        %v745 = vpop.permute.xlu0 %744
        %746 = vrot.lane.b32.xlu0 %v522, 121
        %v747 = vpop.permute.xlu0 %746
        %748 = vrot.lane.b32.xlu0 %v523, 121
        %v749 = vpop.permute.xlu0 %748
        %750 = vrot.lane.b32.xlu0 %v524, 121
        %v751 = vpop.permute.xlu0 %750
        %752 = vrot.lane.b32.xlu0 %v525, 121
        %v753 = vpop.permute.xlu0 %752
        %754 = vrot.lane.b32.xlu0 %v526, 121
        %v755 = vpop.permute.xlu0 %754
        %756 = vrot.lane.b32.xlu0 %v527, 121
        %v757 = vpop.permute.xlu0 %756
        %758 = vrot.lane.b32.xlu0 %v528, 121
        %v759 = vpop.permute.xlu0 %758
        %760 = vrot.lane.b32.xlu0 %v529, 121
        %v761 = vpop.permute.xlu0 %760
        %762 = vrot.lane.b32.xlu0 %v530, 121
        %v763 = vpop.permute.xlu0 %762
        %764 = vrot.lane.b32.xlu0 %v531, 121
        %v765 = vpop.permute.xlu0 %764
        %766 = vrot.lane.b32.xlu0 %v532, 121
        %v767 = vpop.permute.xlu0 %766
        %768 = vrot.lane.b32.xlu0 %v533, 121
        %v769 = vpop.permute.xlu0 %768
        %770 = vrot.lane.b32.xlu0 %v534, 121
        %v771 = vpop.permute.xlu0 %770
        %772 = vrot.lane.b32.xlu0 %v535, 121
        %v773 = vpop.permute.xlu0 %772
        %vm774 = vcmask 990208
        %v775 = vsel %vm774, %v741, %v743
        %v776 = vsel %vm774, %v743, %v745
        %v777 = vsel %vm774, %v745, %v747
        %v778 = vsel %vm774, %v747, %v749
        %v779 = vsel %vm774, %v749, %v751
        %v780 = vsel %vm774, %v751, %v753
        %v781 = vsel %vm774, %v753, %v755
        %v782 = vsel %vm774, %v755, %v757
        %v783 = vsel %vm774, %v757, %v759
        %v784 = vsel %vm774, %v759, %v761
        %v785 = vsel %vm774, %v761, %v763
        %v786 = vsel %vm774, %v763, %v765
        %v787 = vsel %vm774, %v765, %v767
        %v788 = vsel %vm774, %v767, %v769
        %v789 = vsel %vm774, %v769, %v771
        %v790 = vsel %vm774, %v771, %v773
        %791 = vrot.lane.b32.xlu0 %v321, 120
        %v792 = vpop.permute.xlu0 %791
        %793 = vrot.lane.b32.xlu0 %v329, 120
        %v794 = vpop.permute.xlu0 %793
        %795 = vrot.lane.b32.xlu0 %v328, 120
        %v796 = vpop.permute.xlu0 %795
        %797 = vrot.lane.b32.xlu0 %v330, 120
        %v798 = vpop.permute.xlu0 %797
        %799 = vrot.lane.b32.xlu0 %v338, 120
        %v800 = vpop.permute.xlu0 %799
        %801 = vrot.lane.b32.xlu0 %v346, 120
        %v802 = vpop.permute.xlu0 %801
        %803 = vrot.lane.b32.xlu0 %v345, 120
        %v804 = vpop.permute.xlu0 %803
        %805 = vrot.lane.b32.xlu0 %v347, 120
        %v806 = vpop.permute.xlu0 %805
        %807 = vrot.lane.b32.xlu0 %v355, 120
        %v808 = vpop.permute.xlu0 %807
        %809 = vrot.lane.b32.xlu0 %v363, 120
        %v810 = vpop.permute.xlu0 %809
        %811 = vrot.lane.b32.xlu0 %v362, 120
        %v812 = vpop.permute.xlu0 %811
        %813 = vrot.lane.b32.xlu0 %v364, 120
        %v814 = vpop.permute.xlu0 %813
        %815 = vrot.lane.b32.xlu0 %v372, 120
        %v816 = vpop.permute.xlu0 %815
        %817 = vrot.lane.b32.xlu0 %v380, 120
        %v818 = vpop.permute.xlu0 %817
        %819 = vrot.lane.b32.xlu0 %v379, 120
        %v820 = vpop.permute.xlu0 %819
        %821 = vrot.lane.b32.xlu0 %v381, 120
        %v822 = vpop.permute.xlu0 %821
        %823 = vrot.lane.b32.xlu0 %v309, 120
        %v824 = vpop.permute.xlu0 %823
        %vm825 = vcmask 982016
        %v826 = vsel %vm825, %v792, %v794
        %v827 = vsel %vm825, %v794, %v796
        %v828 = vsel %vm825, %v796, %v798
        %v829 = vsel %vm825, %v798, %v800
        %v830 = vsel %vm825, %v800, %v802
        %v831 = vsel %vm825, %v802, %v804
        %v832 = vsel %vm825, %v804, %v806
        %v833 = vsel %vm825, %v806, %v808
        %v834 = vsel %vm825, %v808, %v810
        %v835 = vsel %vm825, %v810, %v812
        %v836 = vsel %vm825, %v812, %v814
        %v837 = vsel %vm825, %v814, %v816
        %v838 = vsel %vm825, %v816, %v818
        %v839 = vsel %vm825, %v818, %v820
        %v840 = vsel %vm825, %v820, %v822
        %v841 = vsel %vm825, %v822, %v824
        %842 = vrot.lane.b32.xlu0 %v383, 119
        %v843 = vpop.permute.xlu0 %842
        %844 = vrot.lane.b32.xlu0 %v384, 119
        %v845 = vpop.permute.xlu0 %844
        %846 = vrot.lane.b32.xlu0 %v385, 119
        %v847 = vpop.permute.xlu0 %846
        %848 = vrot.lane.b32.xlu0 %v386, 119
        %v849 = vpop.permute.xlu0 %848
        %850 = vrot.lane.b32.xlu0 %v387, 119
        %v851 = vpop.permute.xlu0 %850
        %852 = vrot.lane.b32.xlu0 %v388, 119
        %v853 = vpop.permute.xlu0 %852
        %854 = vrot.lane.b32.xlu0 %v389, 119
        %v855 = vpop.permute.xlu0 %854
        %856 = vrot.lane.b32.xlu0 %v390, 119
        %v857 = vpop.permute.xlu0 %856
        %858 = vrot.lane.b32.xlu0 %v391, 119
        %v859 = vpop.permute.xlu0 %858
        %860 = vrot.lane.b32.xlu0 %v392, 119
        %v861 = vpop.permute.xlu0 %860
        %862 = vrot.lane.b32.xlu0 %v393, 119
        %v863 = vpop.permute.xlu0 %862
        %864 = vrot.lane.b32.xlu0 %v394, 119
        %v865 = vpop.permute.xlu0 %864
        %866 = vrot.lane.b32.xlu0 %v395, 119
        %v867 = vpop.permute.xlu0 %866
        %868 = vrot.lane.b32.xlu0 %v396, 119
        %v869 = vpop.permute.xlu0 %868
        %870 = vrot.lane.b32.xlu0 %v397, 119
        %v871 = vpop.permute.xlu0 %870
        %872 = vrot.lane.b32.xlu0 %v398, 119
        %v873 = vpop.permute.xlu0 %872
        %874 = vrot.lane.b32.xlu0 %v399, 119
        %v875 = vpop.permute.xlu0 %874
        %vm876 = vcmask 973824
        %v877 = vsel %vm876, %v843, %v845
        %v878 = vsel %vm876, %v845, %v847
        %v879 = vsel %vm876, %v847, %v849
        %v880 = vsel %vm876, %v849, %v851
        %v881 = vsel %vm876, %v851, %v853
        %v882 = vsel %vm876, %v853, %v855
        %v883 = vsel %vm876, %v855, %v857
        %v884 = vsel %vm876, %v857, %v859
        %v885 = vsel %vm876, %v859, %v861
        %v886 = vsel %vm876, %v861, %v863
        %v887 = vsel %vm876, %v863, %v865
        %v888 = vsel %vm876, %v865, %v867
        %v889 = vsel %vm876, %v867, %v869
        %v890 = vsel %vm876, %v869, %v871
        %v891 = vsel %vm876, %v871, %v873
        %v892 = vsel %vm876, %v873, %v875
        %893 = vrot.lane.b32.xlu0 %v451, 118
        %v894 = vpop.permute.xlu0 %893
        %895 = vrot.lane.b32.xlu0 %v452, 118
        %v896 = vpop.permute.xlu0 %895
        %897 = vrot.lane.b32.xlu0 %v453, 118
        %v898 = vpop.permute.xlu0 %897
        %899 = vrot.lane.b32.xlu0 %v454, 118
        %v900 = vpop.permute.xlu0 %899
        %901 = vrot.lane.b32.xlu0 %v455, 118
        %v902 = vpop.permute.xlu0 %901
        %903 = vrot.lane.b32.xlu0 %v456, 118
        %v904 = vpop.permute.xlu0 %903
        %905 = vrot.lane.b32.xlu0 %v457, 118
        %v906 = vpop.permute.xlu0 %905
        %907 = vrot.lane.b32.xlu0 %v458, 118
        %v908 = vpop.permute.xlu0 %907
        %909 = vrot.lane.b32.xlu0 %v459, 118
        %v910 = vpop.permute.xlu0 %909
        %911 = vrot.lane.b32.xlu0 %v460, 118
        %v912 = vpop.permute.xlu0 %911
        %913 = vrot.lane.b32.xlu0 %v461, 118
        %v914 = vpop.permute.xlu0 %913
        %915 = vrot.lane.b32.xlu0 %v462, 118
        %v916 = vpop.permute.xlu0 %915
        %917 = vrot.lane.b32.xlu0 %v463, 118
        %v918 = vpop.permute.xlu0 %917
        %919 = vrot.lane.b32.xlu0 %v464, 118
        %v920 = vpop.permute.xlu0 %919
        %921 = vrot.lane.b32.xlu0 %v465, 118
        %v922 = vpop.permute.xlu0 %921
        %923 = vrot.lane.b32.xlu0 %v466, 118
        %v924 = vpop.permute.xlu0 %923
        %925 = vrot.lane.b32.xlu0 %v467, 118
        %v926 = vpop.permute.xlu0 %925
        %vm927 = vcmask 965632
        %v928 = vsel %vm927, %v894, %v896
        %v929 = vsel %vm927, %v896, %v898
        %v930 = vsel %vm927, %v898, %v900
        %v931 = vsel %vm927, %v900, %v902
        %v932 = vsel %vm927, %v902, %v904
        %v933 = vsel %vm927, %v904, %v906
        %v934 = vsel %vm927, %v906, %v908
        %v935 = vsel %vm927, %v908, %v910
        %v936 = vsel %vm927, %v910, %v912
        %v937 = vsel %vm927, %v912, %v914
        %v938 = vsel %vm927, %v914, %v916
        %v939 = vsel %vm927, %v916, %v918
        %v940 = vsel %vm927, %v918, %v920
        %v941 = vsel %vm927, %v920, %v922
        %v942 = vsel %vm927, %v922, %v924
        %v943 = vsel %vm927, %v924, %v926
        %944 = vrot.lane.b32.xlu0 %v519, 117
        %v945 = vpop.permute.xlu0 %944
        %946 = vrot.lane.b32.xlu0 %v520, 117
        %v947 = vpop.permute.xlu0 %946
        %948 = vrot.lane.b32.xlu0 %v521, 117
        %v949 = vpop.permute.xlu0 %948
        %950 = vrot.lane.b32.xlu0 %v522, 117
        %v951 = vpop.permute.xlu0 %950
        %952 = vrot.lane.b32.xlu0 %v523, 117
        %v953 = vpop.permute.xlu0 %952
        %954 = vrot.lane.b32.xlu0 %v524, 117
        %v955 = vpop.permute.xlu0 %954
        %956 = vrot.lane.b32.xlu0 %v525, 117
        %v957 = vpop.permute.xlu0 %956
        %958 = vrot.lane.b32.xlu0 %v526, 117
        %v959 = vpop.permute.xlu0 %958
        %960 = vrot.lane.b32.xlu0 %v527, 117
        %v961 = vpop.permute.xlu0 %960
        %962 = vrot.lane.b32.xlu0 %v528, 117
        %v963 = vpop.permute.xlu0 %962
        %964 = vrot.lane.b32.xlu0 %v529, 117
        %v965 = vpop.permute.xlu0 %964
        %966 = vrot.lane.b32.xlu0 %v530, 117
        %v967 = vpop.permute.xlu0 %966
        %968 = vrot.lane.b32.xlu0 %v531, 117
        %v969 = vpop.permute.xlu0 %968
        %970 = vrot.lane.b32.xlu0 %v532, 117
        %v971 = vpop.permute.xlu0 %970
        %972 = vrot.lane.b32.xlu0 %v533, 117
        %v973 = vpop.permute.xlu0 %972
        %974 = vrot.lane.b32.xlu0 %v534, 117
        %v975 = vpop.permute.xlu0 %974
        %976 = vrot.lane.b32.xlu0 %v535, 117
        %v977 = vpop.permute.xlu0 %976
        %vm978 = vcmask 957440
        %v979 = vsel %vm978, %v945, %v947
        %v980 = vsel %vm978, %v947, %v949
        %v981 = vsel %vm978, %v949, %v951
        %v982 = vsel %vm978, %v951, %v953
        %v983 = vsel %vm978, %v953, %v955
        %v984 = vsel %vm978, %v955, %v957
        %v985 = vsel %vm978, %v957, %v959
        %v986 = vsel %vm978, %v959, %v961
        %v987 = vsel %vm978, %v961, %v963
        %v988 = vsel %vm978, %v963, %v965
        %v989 = vsel %vm978, %v965, %v967
        %v990 = vsel %vm978, %v967, %v969
        %v991 = vsel %vm978, %v969, %v971
        %v992 = vsel %vm978, %v971, %v973
        %v993 = vsel %vm978, %v973, %v975
        %v994 = vsel %vm978, %v975, %v977
        %995 = vrot.lane.b32.xlu0 %v321, 116
        %v996 = vpop.permute.xlu0 %995
        %997 = vrot.lane.b32.xlu0 %v329, 116
        %v998 = vpop.permute.xlu0 %997
        %999 = vrot.lane.b32.xlu0 %v328, 116
        %v1000 = vpop.permute.xlu0 %999
        %1001 = vrot.lane.b32.xlu0 %v330, 116
        %v1002 = vpop.permute.xlu0 %1001
        %1003 = vrot.lane.b32.xlu0 %v338, 116
        %v1004 = vpop.permute.xlu0 %1003
        %1005 = vrot.lane.b32.xlu0 %v346, 116
        %v1006 = vpop.permute.xlu0 %1005
        %1007 = vrot.lane.b32.xlu0 %v345, 116
        %v1008 = vpop.permute.xlu0 %1007
        %1009 = vrot.lane.b32.xlu0 %v347, 116
        %v1010 = vpop.permute.xlu0 %1009
        %1011 = vrot.lane.b32.xlu0 %v355, 116
        %v1012 = vpop.permute.xlu0 %1011
        %1013 = vrot.lane.b32.xlu0 %v363, 116
        %v1014 = vpop.permute.xlu0 %1013
        %1015 = vrot.lane.b32.xlu0 %v362, 116
        %v1016 = vpop.permute.xlu0 %1015
        %1017 = vrot.lane.b32.xlu0 %v364, 116
        %v1018 = vpop.permute.xlu0 %1017
        %1019 = vrot.lane.b32.xlu0 %v372, 116
        %v1020 = vpop.permute.xlu0 %1019
        %1021 = vrot.lane.b32.xlu0 %v380, 116
        %v1022 = vpop.permute.xlu0 %1021
        %1023 = vrot.lane.b32.xlu0 %v379, 116
        %v1024 = vpop.permute.xlu0 %1023
        %1025 = vrot.lane.b32.xlu0 %v381, 116
        %v1026 = vpop.permute.xlu0 %1025
        %1027 = vrot.lane.b32.xlu0 %v309, 116
        %v1028 = vpop.permute.xlu0 %1027
        %vm1029 = vcmask 949248
        %v1030 = vsel %vm1029, %v996, %v998
        %v1031 = vsel %vm1029, %v998, %v1000
        %v1032 = vsel %vm1029, %v1000, %v1002
        %v1033 = vsel %vm1029, %v1002, %v1004
        %v1034 = vsel %vm1029, %v1004, %v1006
        %v1035 = vsel %vm1029, %v1006, %v1008
        %v1036 = vsel %vm1029, %v1008, %v1010
        %v1037 = vsel %vm1029, %v1010, %v1012
        %v1038 = vsel %vm1029, %v1012, %v1014
        %v1039 = vsel %vm1029, %v1014, %v1016
        %v1040 = vsel %vm1029, %v1016, %v1018
        %v1041 = vsel %vm1029, %v1018, %v1020
        %v1042 = vsel %vm1029, %v1020, %v1022
        %v1043 = vsel %vm1029, %v1022, %v1024
        %v1044 = vsel %vm1029, %v1024, %v1026
        %v1045 = vsel %vm1029, %v1026, %v1028
        %1046 = vrot.lane.b32.xlu0 %v383, 115
        %v1047 = vpop.permute.xlu0 %1046
        %1048 = vrot.lane.b32.xlu0 %v384, 115
        %v1049 = vpop.permute.xlu0 %1048
        %1050 = vrot.lane.b32.xlu0 %v385, 115
        %v1051 = vpop.permute.xlu0 %1050
        %1052 = vrot.lane.b32.xlu0 %v386, 115
        %v1053 = vpop.permute.xlu0 %1052
        %1054 = vrot.lane.b32.xlu0 %v387, 115
        %v1055 = vpop.permute.xlu0 %1054
        %1056 = vrot.lane.b32.xlu0 %v388, 115
        %v1057 = vpop.permute.xlu0 %1056
        %1058 = vrot.lane.b32.xlu0 %v389, 115
        %v1059 = vpop.permute.xlu0 %1058
        %1060 = vrot.lane.b32.xlu0 %v390, 115
        %v1061 = vpop.permute.xlu0 %1060
        %1062 = vrot.lane.b32.xlu0 %v391, 115
        %v1063 = vpop.permute.xlu0 %1062
        %1064 = vrot.lane.b32.xlu0 %v392, 115
        %v1065 = vpop.permute.xlu0 %1064
        %1066 = vrot.lane.b32.xlu0 %v393, 115
        %v1067 = vpop.permute.xlu0 %1066
        %1068 = vrot.lane.b32.xlu0 %v394, 115
        %v1069 = vpop.permute.xlu0 %1068
        %1070 = vrot.lane.b32.xlu0 %v395, 115
        %v1071 = vpop.permute.xlu0 %1070
        %1072 = vrot.lane.b32.xlu0 %v396, 115
        %v1073 = vpop.permute.xlu0 %1072
        %1074 = vrot.lane.b32.xlu0 %v397, 115
        %v1075 = vpop.permute.xlu0 %1074
        %1076 = vrot.lane.b32.xlu0 %v398, 115
        %v1077 = vpop.permute.xlu0 %1076
        %1078 = vrot.lane.b32.xlu0 %v399, 115
        %v1079 = vpop.permute.xlu0 %1078
        %vm1080 = vcmask 941056
        %v1081 = vsel %vm1080, %v1047, %v1049
        %v1082 = vsel %vm1080, %v1049, %v1051
        %v1083 = vsel %vm1080, %v1051, %v1053
        %v1084 = vsel %vm1080, %v1053, %v1055
        %v1085 = vsel %vm1080, %v1055, %v1057
        %v1086 = vsel %vm1080, %v1057, %v1059
        %v1087 = vsel %vm1080, %v1059, %v1061
        %v1088 = vsel %vm1080, %v1061, %v1063
        %v1089 = vsel %vm1080, %v1063, %v1065
        %v1090 = vsel %vm1080, %v1065, %v1067
        %v1091 = vsel %vm1080, %v1067, %v1069
        %v1092 = vsel %vm1080, %v1069, %v1071
        %v1093 = vsel %vm1080, %v1071, %v1073
        %v1094 = vsel %vm1080, %v1073, %v1075
        %v1095 = vsel %vm1080, %v1075, %v1077
        %v1096 = vsel %vm1080, %v1077, %v1079
        %1097 = vrot.lane.b32.xlu0 %v451, 114
        %v1098 = vpop.permute.xlu0 %1097
        %1099 = vrot.lane.b32.xlu0 %v452, 114
        %v1100 = vpop.permute.xlu0 %1099
        %1101 = vrot.lane.b32.xlu0 %v453, 114
        %v1102 = vpop.permute.xlu0 %1101
        %1103 = vrot.lane.b32.xlu0 %v454, 114
        %v1104 = vpop.permute.xlu0 %1103
        %1105 = vrot.lane.b32.xlu0 %v455, 114
        %v1106 = vpop.permute.xlu0 %1105
        %1107 = vrot.lane.b32.xlu0 %v456, 114
        %v1108 = vpop.permute.xlu0 %1107
        %1109 = vrot.lane.b32.xlu0 %v457, 114
        %v1110 = vpop.permute.xlu0 %1109
        %1111 = vrot.lane.b32.xlu0 %v458, 114
        %v1112 = vpop.permute.xlu0 %1111
        %1113 = vrot.lane.b32.xlu0 %v459, 114
        %v1114 = vpop.permute.xlu0 %1113
        %1115 = vrot.lane.b32.xlu0 %v460, 114
        %v1116 = vpop.permute.xlu0 %1115
        %1117 = vrot.lane.b32.xlu0 %v461, 114
        %v1118 = vpop.permute.xlu0 %1117
        %1119 = vrot.lane.b32.xlu0 %v462, 114
        %v1120 = vpop.permute.xlu0 %1119
        %1121 = vrot.lane.b32.xlu0 %v463, 114
        %v1122 = vpop.permute.xlu0 %1121
        %1123 = vrot.lane.b32.xlu0 %v464, 114
        %v1124 = vpop.permute.xlu0 %1123
        %1125 = vrot.lane.b32.xlu0 %v465, 114
        %v1126 = vpop.permute.xlu0 %1125
        %1127 = vrot.lane.b32.xlu0 %v466, 114
        %v1128 = vpop.permute.xlu0 %1127
        %1129 = vrot.lane.b32.xlu0 %v467, 114
        %v1130 = vpop.permute.xlu0 %1129
        %vm1131 = vcmask 932864
        %v1132 = vsel %vm1131, %v1098, %v1100
        %v1133 = vsel %vm1131, %v1100, %v1102
        %v1134 = vsel %vm1131, %v1102, %v1104
        %v1135 = vsel %vm1131, %v1104, %v1106
        %v1136 = vsel %vm1131, %v1106, %v1108
        %v1137 = vsel %vm1131, %v1108, %v1110
        %v1138 = vsel %vm1131, %v1110, %v1112
        %v1139 = vsel %vm1131, %v1112, %v1114
        %v1140 = vsel %vm1131, %v1114, %v1116
        %v1141 = vsel %vm1131, %v1116, %v1118
        %v1142 = vsel %vm1131, %v1118, %v1120
        %v1143 = vsel %vm1131, %v1120, %v1122
        %v1144 = vsel %vm1131, %v1122, %v1124
        %v1145 = vsel %vm1131, %v1124, %v1126
        %v1146 = vsel %vm1131, %v1126, %v1128
        %v1147 = vsel %vm1131, %v1128, %v1130
        %1148 = vrot.lane.b32.xlu0 %v519, 113
        %v1149 = vpop.permute.xlu0 %1148
        %1150 = vrot.lane.b32.xlu0 %v520, 113
        %v1151 = vpop.permute.xlu0 %1150
        %1152 = vrot.lane.b32.xlu0 %v521, 113
        %v1153 = vpop.permute.xlu0 %1152
        %1154 = vrot.lane.b32.xlu0 %v522, 113
        %v1155 = vpop.permute.xlu0 %1154
        %1156 = vrot.lane.b32.xlu0 %v523, 113
        %v1157 = vpop.permute.xlu0 %1156
        %1158 = vrot.lane.b32.xlu0 %v524, 113
        %v1159 = vpop.permute.xlu0 %1158
        %1160 = vrot.lane.b32.xlu0 %v525, 113
        %v1161 = vpop.permute.xlu0 %1160
        %1162 = vrot.lane.b32.xlu0 %v526, 113
        %v1163 = vpop.permute.xlu0 %1162
        %1164 = vrot.lane.b32.xlu0 %v527, 113
        %v1165 = vpop.permute.xlu0 %1164
        %1166 = vrot.lane.b32.xlu0 %v528, 113
        %v1167 = vpop.permute.xlu0 %1166
        %1168 = vrot.lane.b32.xlu0 %v529, 113
        %v1169 = vpop.permute.xlu0 %1168
        %1170 = vrot.lane.b32.xlu0 %v530, 113
        %v1171 = vpop.permute.xlu0 %1170
        %1172 = vrot.lane.b32.xlu0 %v531, 113
        %v1173 = vpop.permute.xlu0 %1172
        %1174 = vrot.lane.b32.xlu0 %v532, 113
        %v1175 = vpop.permute.xlu0 %1174
        %1176 = vrot.lane.b32.xlu0 %v533, 113
        %v1177 = vpop.permute.xlu0 %1176
        %1178 = vrot.lane.b32.xlu0 %v534, 113
        %v1179 = vpop.permute.xlu0 %1178
        %1180 = vrot.lane.b32.xlu0 %v535, 113
        %v1181 = vpop.permute.xlu0 %1180
        %vm1182 = vcmask 924672
        %v1183 = vsel %vm1182, %v1149, %v1151
        %v1184 = vsel %vm1182, %v1151, %v1153
        %v1185 = vsel %vm1182, %v1153, %v1155
        %v1186 = vsel %vm1182, %v1155, %v1157
        %v1187 = vsel %vm1182, %v1157, %v1159
        %v1188 = vsel %vm1182, %v1159, %v1161
        %v1189 = vsel %vm1182, %v1161, %v1163
        %v1190 = vsel %vm1182, %v1163, %v1165
        %v1191 = vsel %vm1182, %v1165, %v1167
        %v1192 = vsel %vm1182, %v1167, %v1169
        %v1193 = vsel %vm1182, %v1169, %v1171
        %v1194 = vsel %vm1182, %v1171, %v1173
        %v1195 = vsel %vm1182, %v1173, %v1175
        %v1196 = vsel %vm1182, %v1175, %v1177
        %v1197 = vsel %vm1182, %v1177, %v1179
        %v1198 = vsel %vm1182, %v1179, %v1181
        %vm1199 = vcmask 1041408
        %v1202 = vsel %vm1199, %v321, %v435
        %v1205 = vsel %vm1199, %v329, %v436
        %v1208 = vsel %vm1199, %v328, %v437
        %v1211 = vsel %vm1199, %v330, %v438
        %v1214 = vsel %vm1199, %v338, %v439
        %v1217 = vsel %vm1199, %v346, %v440
        %v1220 = vsel %vm1199, %v345, %v441
        %v1223 = vsel %vm1199, %v347, %v442
        %v1226 = vsel %vm1199, %v355, %v443
        %v1229 = vsel %vm1199, %v363, %v444
        %v1232 = vsel %vm1199, %v362, %v445
        %v1235 = vsel %vm1199, %v364, %v446
        %v1238 = vsel %vm1199, %v372, %v447
        %v1241 = vsel %vm1199, %v380, %v448
        %v1244 = vsel %vm1199, %v379, %v449
        %v1247 = vsel %vm1199, %v381, %v450
        %vm1248 = vcmask 1043456
        %v1250 = vsel %vm1248, %v1202, %v503
        %v1252 = vsel %vm1248, %v1205, %v504
        %v1254 = vsel %vm1248, %v1208, %v505
        %v1256 = vsel %vm1248, %v1211, %v506
        %v1258 = vsel %vm1248, %v1214, %v507
        %v1260 = vsel %vm1248, %v1217, %v508
        %v1262 = vsel %vm1248, %v1220, %v509
        %v1264 = vsel %vm1248, %v1223, %v510
        %v1266 = vsel %vm1248, %v1226, %v511
        %v1268 = vsel %vm1248, %v1229, %v512
        %v1270 = vsel %vm1248, %v1232, %v513
        %v1272 = vsel %vm1248, %v1235, %v514
        %v1274 = vsel %vm1248, %v1238, %v515
        %v1276 = vsel %vm1248, %v1241, %v516
        %v1278 = vsel %vm1248, %v1244, %v517
        %v1280 = vsel %vm1248, %v1247, %v518
        %vm1281 = vcmask 1045504
        %v1283 = vsel %vm1281, %v1250, %v571
        %v1286 = vsel %vm1281, %v1252, %v572
        %v1289 = vsel %vm1281, %v1254, %v573
        %v1292 = vsel %vm1281, %v1256, %v574
        %v1295 = vsel %vm1281, %v1258, %v575
        %v1298 = vsel %vm1281, %v1260, %v576
        %v1301 = vsel %vm1281, %v1262, %v577
        %v1304 = vsel %vm1281, %v1264, %v578
        %v1307 = vsel %vm1281, %v1266, %v579
        %v1310 = vsel %vm1281, %v1268, %v580
        %v1313 = vsel %vm1281, %v1270, %v581
        %v1316 = vsel %vm1281, %v1272, %v582
        %v1319 = vsel %vm1281, %v1274, %v583
        %v1322 = vsel %vm1281, %v1276, %v584
        %v1325 = vsel %vm1281, %v1278, %v585
        %v1328 = vsel %vm1281, %v1280, %v586
        %v1332 = vsel %vm1199, %v622, %v673
        %v1335 = vsel %vm1199, %v623, %v674
        %v1338 = vsel %vm1199, %v624, %v675
        %v1341 = vsel %vm1199, %v625, %v676
        %v1344 = vsel %vm1199, %v626, %v677
        %v1347 = vsel %vm1199, %v627, %v678
        %v1350 = vsel %vm1199, %v628, %v679
        %v1353 = vsel %vm1199, %v629, %v680
        %v1356 = vsel %vm1199, %v630, %v681
        %v1359 = vsel %vm1199, %v631, %v682
        %v1362 = vsel %vm1199, %v632, %v683
        %v1365 = vsel %vm1199, %v633, %v684
        %v1368 = vsel %vm1199, %v634, %v685
        %v1371 = vsel %vm1199, %v635, %v686
        %v1374 = vsel %vm1199, %v636, %v687
        %v1377 = vsel %vm1199, %v637, %v688
        %v1379 = vsel %vm1248, %v1332, %v724
        %v1381 = vsel %vm1248, %v1335, %v725
        %v1383 = vsel %vm1248, %v1338, %v726
        %v1385 = vsel %vm1248, %v1341, %v727
        %v1387 = vsel %vm1248, %v1344, %v728
        %v1389 = vsel %vm1248, %v1347, %v729
        %v1391 = vsel %vm1248, %v1350, %v730
        %v1393 = vsel %vm1248, %v1353, %v731
        %v1395 = vsel %vm1248, %v1356, %v732
        %v1397 = vsel %vm1248, %v1359, %v733
        %v1399 = vsel %vm1248, %v1362, %v734
        %v1401 = vsel %vm1248, %v1365, %v735
        %v1403 = vsel %vm1248, %v1368, %v736
        %v1405 = vsel %vm1248, %v1371, %v737
        %v1407 = vsel %vm1248, %v1374, %v738
        %v1409 = vsel %vm1248, %v1377, %v739
        %v1411 = vsel %vm1281, %v1379, %v775
        %v1414 = vsel %vm1281, %v1381, %v776
        %v1417 = vsel %vm1281, %v1383, %v777
        %v1420 = vsel %vm1281, %v1385, %v778
        %v1423 = vsel %vm1281, %v1387, %v779
        %v1426 = vsel %vm1281, %v1389, %v780
        %v1429 = vsel %vm1281, %v1391, %v781
        %v1432 = vsel %vm1281, %v1393, %v782
        %v1435 = vsel %vm1281, %v1395, %v783
        %v1438 = vsel %vm1281, %v1397, %v784
        %v1441 = vsel %vm1281, %v1399, %v785
        %v1444 = vsel %vm1281, %v1401, %v786
        %v1447 = vsel %vm1281, %v1403, %v787
        %v1450 = vsel %vm1281, %v1405, %v788
        %v1453 = vsel %vm1281, %v1407, %v789
        %v1456 = vsel %vm1281, %v1409, %v790
        %v1460 = vsel %vm1199, %v826, %v877
        %v1463 = vsel %vm1199, %v827, %v878
        %v1466 = vsel %vm1199, %v828, %v879
        %v1469 = vsel %vm1199, %v829, %v880
        %v1472 = vsel %vm1199, %v830, %v881
        %v1475 = vsel %vm1199, %v831, %v882
        %v1478 = vsel %vm1199, %v832, %v883
        %v1481 = vsel %vm1199, %v833, %v884
        %v1484 = vsel %vm1199, %v834, %v885
        %v1487 = vsel %vm1199, %v835, %v886
        %v1490 = vsel %vm1199, %v836, %v887
        %v1493 = vsel %vm1199, %v837, %v888
        %v1496 = vsel %vm1199, %v838, %v889
        %v1499 = vsel %vm1199, %v839, %v890
        %v1502 = vsel %vm1199, %v840, %v891
        %v1505 = vsel %vm1199, %v841, %v892
        %v1507 = vsel %vm1248, %v1460, %v928
        %v1509 = vsel %vm1248, %v1463, %v929
        %v1511 = vsel %vm1248, %v1466, %v930
        %v1513 = vsel %vm1248, %v1469, %v931
        %v1515 = vsel %vm1248, %v1472, %v932
        %v1517 = vsel %vm1248, %v1475, %v933
        %v1519 = vsel %vm1248, %v1478, %v934
        %v1521 = vsel %vm1248, %v1481, %v935
        %v1523 = vsel %vm1248, %v1484, %v936
        %v1525 = vsel %vm1248, %v1487, %v937
        %v1527 = vsel %vm1248, %v1490, %v938
        %v1529 = vsel %vm1248, %v1493, %v939
        %v1531 = vsel %vm1248, %v1496, %v940
        %v1533 = vsel %vm1248, %v1499, %v941
        %v1535 = vsel %vm1248, %v1502, %v942
        %v1537 = vsel %vm1248, %v1505, %v943
        %v1539 = vsel %vm1281, %v1507, %v979
        %v1542 = vsel %vm1281, %v1509, %v980
        %v1545 = vsel %vm1281, %v1511, %v981
        %v1548 = vsel %vm1281, %v1513, %v982
        %v1551 = vsel %vm1281, %v1515, %v983
        %v1554 = vsel %vm1281, %v1517, %v984
        %v1557 = vsel %vm1281, %v1519, %v985
        %v1560 = vsel %vm1281, %v1521, %v986
        %v1563 = vsel %vm1281, %v1523, %v987
        %v1566 = vsel %vm1281, %v1525, %v988
        %v1569 = vsel %vm1281, %v1527, %v989
        %v1572 = vsel %vm1281, %v1529, %v990
        %v1575 = vsel %vm1281, %v1531, %v991
        %v1578 = vsel %vm1281, %v1533, %v992
        %v1581 = vsel %vm1281, %v1535, %v993
        %v1584 = vsel %vm1281, %v1537, %v994
        %v1588 = vsel %vm1199, %v1030, %v1081
        %v1591 = vsel %vm1199, %v1031, %v1082
        %v1594 = vsel %vm1199, %v1032, %v1083
        %v1597 = vsel %vm1199, %v1033, %v1084
        %v1600 = vsel %vm1199, %v1034, %v1085
        %v1603 = vsel %vm1199, %v1035, %v1086
        %v1606 = vsel %vm1199, %v1036, %v1087
        %v1609 = vsel %vm1199, %v1037, %v1088
        %v1612 = vsel %vm1199, %v1038, %v1089
        %v1615 = vsel %vm1199, %v1039, %v1090
        %v1618 = vsel %vm1199, %v1040, %v1091
        %v1621 = vsel %vm1199, %v1041, %v1092
        %v1624 = vsel %vm1199, %v1042, %v1093
        %v1627 = vsel %vm1199, %v1043, %v1094
        %v1630 = vsel %vm1199, %v1044, %v1095
        %v1633 = vsel %vm1199, %v1045, %v1096
        %v1635 = vsel %vm1248, %v1588, %v1132
        %v1637 = vsel %vm1248, %v1591, %v1133
        %v1639 = vsel %vm1248, %v1594, %v1134
        %v1641 = vsel %vm1248, %v1597, %v1135
        %v1643 = vsel %vm1248, %v1600, %v1136
        %v1645 = vsel %vm1248, %v1603, %v1137
        %v1647 = vsel %vm1248, %v1606, %v1138
        %v1649 = vsel %vm1248, %v1609, %v1139
        %v1651 = vsel %vm1248, %v1612, %v1140
        %v1653 = vsel %vm1248, %v1615, %v1141
        %v1655 = vsel %vm1248, %v1618, %v1142
        %v1657 = vsel %vm1248, %v1621, %v1143
        %v1659 = vsel %vm1248, %v1624, %v1144
        %v1661 = vsel %vm1248, %v1627, %v1145
        %v1663 = vsel %vm1248, %v1630, %v1146
        %v1665 = vsel %vm1248, %v1633, %v1147
        %v1667 = vsel %vm1281, %v1635, %v1183
        %v1670 = vsel %vm1281, %v1637, %v1184
        %v1673 = vsel %vm1281, %v1639, %v1185
        %v1676 = vsel %vm1281, %v1641, %v1186
        %v1679 = vsel %vm1281, %v1643, %v1187
        %v1682 = vsel %vm1281, %v1645, %v1188
        %v1685 = vsel %vm1281, %v1647, %v1189
        %v1688 = vsel %vm1281, %v1649, %v1190
        %v1691 = vsel %vm1281, %v1651, %v1191
        %v1694 = vsel %vm1281, %v1653, %v1192
        %v1697 = vsel %vm1281, %v1655, %v1193
        %v1700 = vsel %vm1281, %v1657, %v1194
        %v1703 = vsel %vm1281, %v1659, %v1195
        %v1706 = vsel %vm1281, %v1661, %v1196
        %v1709 = vsel %vm1281, %v1663, %v1197
        %v1712 = vsel %vm1281, %v1665, %v1198
        %v1716 = vsel %vm1199, %v309, %v433
        %v1718 = vsel %vm1248, %v1716, %v501
        %v1720 = vsel %vm1281, %v1718, %v569
        %1738 = vrot.lane.b32.xlu0 %v1283, 112
        %v1739 = vpop.permute.xlu0 %1738
        %1740 = vrot.lane.b32.xlu0 %v1286, 112
        %v1741 = vpop.permute.xlu0 %1740
        %1742 = vrot.lane.b32.xlu0 %v1289, 112
        %v1743 = vpop.permute.xlu0 %1742
        %1744 = vrot.lane.b32.xlu0 %v1292, 112
        %v1745 = vpop.permute.xlu0 %1744
        %1746 = vrot.lane.b32.xlu0 %v1295, 112
        %v1747 = vpop.permute.xlu0 %1746
        %1748 = vrot.lane.b32.xlu0 %v1298, 112
        %v1749 = vpop.permute.xlu0 %1748
        %1750 = vrot.lane.b32.xlu0 %v1301, 112
        %v1751 = vpop.permute.xlu0 %1750
        %1752 = vrot.lane.b32.xlu0 %v1304, 112
        %v1753 = vpop.permute.xlu0 %1752
        %1754 = vrot.lane.b32.xlu0 %v1307, 112
        %v1755 = vpop.permute.xlu0 %1754
        %1756 = vrot.lane.b32.xlu0 %v1310, 112
        %v1757 = vpop.permute.xlu0 %1756
        %1758 = vrot.lane.b32.xlu0 %v1313, 112
        %v1759 = vpop.permute.xlu0 %1758
        %1760 = vrot.lane.b32.xlu0 %v1316, 112
        %v1761 = vpop.permute.xlu0 %1760
        %1762 = vrot.lane.b32.xlu0 %v1319, 112
        %v1763 = vpop.permute.xlu0 %1762
        %1764 = vrot.lane.b32.xlu0 %v1322, 112
        %v1765 = vpop.permute.xlu0 %1764
        %1766 = vrot.lane.b32.xlu0 %v1325, 112
        %v1767 = vpop.permute.xlu0 %1766
        %1768 = vrot.lane.b32.xlu0 %v1328, 112
        %v1769 = vpop.permute.xlu0 %1768
        %1770 = vrot.lane.b32.xlu0 %v1720, 112
        %v1771 = vpop.permute.xlu0 %1770
        %1772 = vrot.lane.b32.xlu0 %v622, 112
        %v1773 = vpop.permute.xlu0 %1772
        %1774 = vrot.lane.b32.xlu0 %v623, 112
        %v1775 = vpop.permute.xlu0 %1774
        %1776 = vrot.lane.b32.xlu0 %v624, 112
        %v1777 = vpop.permute.xlu0 %1776
        %1778 = vrot.lane.b32.xlu0 %v625, 112
        %v1779 = vpop.permute.xlu0 %1778
        %1780 = vrot.lane.b32.xlu0 %v626, 112
        %v1781 = vpop.permute.xlu0 %1780
        %1782 = vrot.lane.b32.xlu0 %v627, 112
        %v1783 = vpop.permute.xlu0 %1782
        %1784 = vrot.lane.b32.xlu0 %v628, 112
        %v1785 = vpop.permute.xlu0 %1784
        %1786 = vrot.lane.b32.xlu0 %v629, 112
        %v1787 = vpop.permute.xlu0 %1786
        %1788 = vrot.lane.b32.xlu0 %v630, 112
        %v1789 = vpop.permute.xlu0 %1788
        %1790 = vrot.lane.b32.xlu0 %v631, 112
        %v1791 = vpop.permute.xlu0 %1790
        %1792 = vrot.lane.b32.xlu0 %v632, 112
        %v1793 = vpop.permute.xlu0 %1792
        %1794 = vrot.lane.b32.xlu0 %v633, 112
        %v1795 = vpop.permute.xlu0 %1794
        %1796 = vrot.lane.b32.xlu0 %v634, 112
        %v1797 = vpop.permute.xlu0 %1796
        %1798 = vrot.lane.b32.xlu0 %v635, 112
        %v1799 = vpop.permute.xlu0 %1798
        %1800 = vrot.lane.b32.xlu0 %v636, 112
        %v1801 = vpop.permute.xlu0 %1800
        %1802 = vrot.lane.b32.xlu0 %v637, 112
        %v1803 = vpop.permute.xlu0 %1802
        %1804 = vrot.lane.b32.xlu0 %v620, 112
        %v1805 = vpop.permute.xlu0 %1804
        %vm1806 = vcmask 916480
        %v1807 = vsel %vm1806, %v1739, %v1741
        %v1808 = vsel %vm1806, %v1741, %v1743
        %v1809 = vsel %vm1806, %v1743, %v1745
        %v1810 = vsel %vm1806, %v1745, %v1747
        %v1811 = vsel %vm1806, %v1747, %v1749
        %v1812 = vsel %vm1806, %v1749, %v1751
        %v1813 = vsel %vm1806, %v1751, %v1753
        %v1814 = vsel %vm1806, %v1753, %v1755
        %v1815 = vsel %vm1806, %v1755, %v1757
        %v1816 = vsel %vm1806, %v1757, %v1759
        %v1817 = vsel %vm1806, %v1759, %v1761
        %v1818 = vsel %vm1806, %v1761, %v1763
        %v1819 = vsel %vm1806, %v1763, %v1765
        %v1820 = vsel %vm1806, %v1765, %v1767
        %v1821 = vsel %vm1806, %v1767, %v1769
        %v1822 = vsel %vm1806, %v1769, %v1771
        %v1823 = vsel %vm1806, %v1773, %v1775
        %v1824 = vsel %vm1806, %v1775, %v1777
        %v1825 = vsel %vm1806, %v1777, %v1779
        %v1826 = vsel %vm1806, %v1779, %v1781
        %v1827 = vsel %vm1806, %v1781, %v1783
        %v1828 = vsel %vm1806, %v1783, %v1785
        %v1829 = vsel %vm1806, %v1785, %v1787
        %v1830 = vsel %vm1806, %v1787, %v1789
        %v1831 = vsel %vm1806, %v1789, %v1791
        %v1832 = vsel %vm1806, %v1791, %v1793
        %v1833 = vsel %vm1806, %v1793, %v1795
        %v1834 = vsel %vm1806, %v1795, %v1797
        %v1835 = vsel %vm1806, %v1797, %v1799
        %v1836 = vsel %vm1806, %v1799, %v1801
        %v1837 = vsel %vm1806, %v1801, %v1803
        %v1838 = vsel %vm1806, %v1803, %v1805
        %v1855 = vld [vmem:[#allocation5] sm:$0xf]
        %v1856 = vld [vmem:[#allocation5 + $0x4] sm:$0xf]
        %v1857 = vld [vmem:[#allocation5 + $0x8] sm:$0xf]
        %v1858 = vld [vmem:[#allocation5 + $0xc] sm:$0xf]
        %v1859 = vld [vmem:[#allocation5 + $0x10] sm:$0xf]
        %v1860 = vld [vmem:[#allocation5 + $0x14] sm:$0xf]
        %v1861 = vld [vmem:[#allocation5 + $0x18] sm:$0xf]
        %v1862 = vld [vmem:[#allocation5 + $0x1c] sm:$0xf]
        %v1863 = vld [vmem:[%s3] sm:$0xff]
        %v1864 = vld [vmem:[%s3 + $0x8] sm:$0xff]
        %v1865 = vld [vmem:[%s3 + $0x10] sm:$0xff]
        %v1866 = vld [vmem:[%s3 + $0x18] sm:$0xff]
        %v1867 = vld [vmem:[%s3 + $0x20] sm:$0xff]
        %v1868 = vld [vmem:[%s3 + $0x28] sm:$0xff]
        %v1869 = vld [vmem:[%s3 + $0x30] sm:$0xff]
        %v1870 = vld [vmem:[%s3 + $0x38] sm:$0xff]
        %1872 = vset.pattern.permute.xlu0 0
        %1873 = vperm.xlu0 %1872, %v1863
        %v1874 = vpop.permute.xlu0 %1873
        %1877 = vset.pattern.permute.xlu0 0
        %1878 = vperm.xlu0 %1877, %v1864
        %v1879 = vpop.permute.xlu0 %1878
        %1882 = vset.pattern.permute.xlu0 0
        %1883 = vperm.xlu0 %1882, %v1865
        %v1884 = vpop.permute.xlu0 %1883
        %1887 = vset.pattern.permute.xlu0 0
        %1888 = vperm.xlu0 %1887, %v1866
        %v1889 = vpop.permute.xlu0 %1888
        %1892 = vset.pattern.permute.xlu0 0
        %1893 = vperm.xlu0 %1892, %v1867
        %v1894 = vpop.permute.xlu0 %1893
        %1897 = vset.pattern.permute.xlu0 0
        %1898 = vperm.xlu0 %1897, %v1868
        %v1899 = vpop.permute.xlu0 %1898
        %1902 = vset.pattern.permute.xlu0 0
        %1903 = vperm.xlu0 %1902, %v1869
        %v1904 = vpop.permute.xlu0 %1903
        %1907 = vset.pattern.permute.xlu0 0
        %1908 = vperm.xlu0 %1907, %v1870
        %v1909 = vpop.permute.xlu0 %1908
        %v1919 = vunpack.c.l.b16 %v1855
        %v1920 = vunpack.c.l.b16 %v1856
        %v1921 = vunpack.c.l.b16 %v1857
        %v1922 = vunpack.c.l.b16 %v1858
        %v1923 = vunpack.c.l.b16 %v1859
        %v1924 = vunpack.c.l.b16 %v1860
        %v1925 = vunpack.c.l.b16 %v1861
        %v1926 = vunpack.c.l.b16 %v1862
        %v1927 = vpack.c.b16 %v1920, %v1919
        %v1928 = vpack.c.b16 %v1922, %v1921
        %v1929 = vpack.c.b16 %v1924, %v1923
        %v1930 = vpack.c.b16 %v1926, %v1925
        %vm1931 = vcmask 687104
        %v1933 = vsel %vm1931, %v1927, 0
        %v1936 = vsel %vm1931, %v1928, 0
        %v1939 = vsel %vm1931, %v1929, 0
        %v1942 = vsel %vm1931, %v1930, 0
        %v1945 = vsel %vm1199, %v1823, 0
        %v1948 = vsel %vm1199, %v1824, 0
        %v1951 = vsel %vm1199, %v1825, 0
        %v1954 = vsel %vm1199, %v1826, 0
        %v1957 = vsel %vm1199, %v1827, 0
        %v1960 = vsel %vm1199, %v1828, 0
        %v1963 = vsel %vm1199, %v1829, 0
        %v1966 = vsel %vm1199, %v1830, 0
        %v1969 = vsel %vm1199, %v1831, 0
        %v1972 = vsel %vm1199, %v1832, 0
        %v1975 = vsel %vm1199, %v1833, 0
        %v1978 = vsel %vm1199, %v1834, 0
        %v1981 = vsel %vm1199, %v1835, 0
        %v1984 = vsel %vm1199, %v1836, 0
        %v1987 = vsel %vm1199, %v1837, 0
        %v1990 = vsel %vm1199, %v1838, 0
        %1992 = vmatprep.subr.bf16.mxu0 %v1286
        %1993 = vmatpush1.bf16.msra.mxu0 %v1283
        %1994 = vmatprep.subr.bf16.mxu0 %v1414
        %1995 = vmatpush1.bf16.msra.mxu0 %v1411
        %1996 = vmatprep.subr.bf16.mxu0 %v1542
        %1997 = vmatpush1.bf16.msra.mxu0 %v1539
        %1998 = vmatprep.subr.bf16.mxu0 %v1670
        %1999 = vmatpush1.bf16.msra.mxu0 %v1667
        %2000 = vmatprep.subr.bf16.mxu0 %v1808
        %2001 = vmatpush1.bf16.msra.mxu0 %v1807
        %2002 = vmatprep.subr.bf16.mxu0 %v1948
        %2003 = vmatpush1.bf16.msra.mxu0 %v1945
        %2004 = vmatprep.subr.bf16.mxu0 0
        %2005 = vmatpush1.bf16.msra.mxu0 0
        %2006 = vmatprep.subr.bf16.mxu0 0
        %2007 = vmatpush1.bf16.msra.mxu0 0
        %2008 = vmatprep.subr.bf16.mxu0 0
        %2009 = vmatpush1.bf16.msra.mxu0 0
        %2010 = vmatprep.subr.bf16.mxu0 0
        %2011 = vmatpush1.bf16.msra.mxu0 0
        %2012 = vmatprep.subr.bf16.mxu0 0
        %2013 = vmatpush1.bf16.msra.mxu0 0
        %2014 = vmatprep.subr.bf16.mxu0 0
        %2015 = vmatpush1.bf16.msra.mxu0 0
        %2016 = vmatprep.subr.bf16.mxu0 0
        %2017 = vmatpush1.bf16.msra.mxu0 0
        %2018 = vmatprep.subr.bf16.mxu0 0
        %2019 = vmatpush1.bf16.msra.mxu0 0
        %2020 = vmatprep.subr.bf16.mxu0 0
        %2021 = vmatpush1.bf16.msra.mxu0 0
        %2022 = vmatprep.subr.bf16.mxu0 0
        %2023 = vmatpush1.bf16.msra.mxu0 0
        %2024 = vmatprep.mubr.bf16.mxu0 0
        %2025 = vmatmul.mubr.bf16.gmra.mrb[0].mxu0 %v1933
        %v2026 = vpop.f32.mrb[0].mxu0
        %v2027 = vadd.f32 %v1874, %v2026
        %v2028 = vpop.f32.mrb[0].mxu0
        %v2029 = vadd.f32 %v1874, %v2028
        %v2030 = vpop.f32.mrb[0].mxu0
        %v2031 = vadd.f32 %v1879, %v2030
        %v2032 = vpop.f32.mrb[0].mxu0
        %v2033 = vadd.f32 %v1879, %v2032
        %2034 = vmatprep.mubr.bf16.mxu0 0
        %2035 = vmatmul.mubr.bf16.gmra.mrb[0].mxu0 %v1936
        %v2036 = vpop.f32.mrb[0].mxu0
        %v2037 = vadd.f32 %v1884, %v2036
        %v2038 = vpop.f32.mrb[0].mxu0
        %v2039 = vadd.f32 %v1884, %v2038
        %v2040 = vpop.f32.mrb[0].mxu0
        %v2041 = vadd.f32 %v1889, %v2040
        %v2042 = vpop.f32.mrb[0].mxu0
        %v2043 = vadd.f32 %v1889, %v2042
        %2044 = vmatprep.mubr.bf16.mxu0 0
        %2045 = vmatmul.mubr.bf16.gmra.mrb[0].mxu0 %v1939
        %v2046 = vpop.f32.mrb[0].mxu0
        %v2047 = vadd.f32 %v1894, %v2046
        %v2048 = vpop.f32.mrb[0].mxu0
        %v2049 = vadd.f32 %v1894, %v2048
        %v2050 = vpop.f32.mrb[0].mxu0
        %v2051 = vadd.f32 %v1899, %v2050
        %v2052 = vpop.f32.mrb[0].mxu0
        %v2053 = vadd.f32 %v1899, %v2052
        %2054 = vmatprep.mubr.bf16.mxu0 0
        %2055 = vmatmul.mubr.bf16.gmra.mrb[0].mxu0 %v1942
        %v2056 = vpop.f32.mrb[0].mxu0
        %v2057 = vadd.f32 %v1904, %v2056
        %v2058 = vpop.f32.mrb[0].mxu0
        %v2059 = vadd.f32 %v1904, %v2058
        %v2060 = vpop.f32.mrb[0].mxu0
        %v2061 = vadd.f32 %v1909, %v2060
        %v2062 = vpop.f32.mrb[0].mxu0
        %v2063 = vadd.f32 %v1909, %v2062
        %2064 = vdwg.mxu0
        %2065 = vmatprep.subr.bf16.mxu0 %v1292
        %2066 = vmatpush1.bf16.msra.mxu0 %v1289
        %2067 = vmatprep.subr.bf16.mxu0 %v1420
        %2068 = vmatpush1.bf16.msra.mxu0 %v1417
        %2069 = vmatprep.subr.bf16.mxu0 %v1548
        %2070 = vmatpush1.bf16.msra.mxu0 %v1545
        %2071 = vmatprep.subr.bf16.mxu0 %v1676
        %2072 = vmatpush1.bf16.msra.mxu0 %v1673
        %2073 = vmatprep.subr.bf16.mxu0 %v1810
        %2074 = vmatpush1.bf16.msra.mxu0 %v1809
        %2075 = vmatprep.subr.bf16.mxu0 %v1954
        %2076 = vmatpush1.bf16.msra.mxu0 %v1951
        %2077 = vmatprep.subr.bf16.mxu0 0
        %2078 = vmatpush1.bf16.msra.mxu0 0
        %2079 = vmatprep.subr.bf16.mxu0 0
        %2080 = vmatpush1.bf16.msra.mxu0 0
        %2081 = vmatprep.subr.bf16.mxu0 0
        %2082 = vmatpush1.bf16.msra.mxu0 0
        %2083 = vmatprep.subr.bf16.mxu0 0
        %2084 = vmatpush1.bf16.msra.mxu0 0
        %2085 = vmatprep.subr.bf16.mxu0 0
        %2086 = vmatpush1.bf16.msra.mxu0 0
        %2087 = vmatprep.subr.bf16.mxu0 0
        %2088 = vmatpush1.bf16.msra.mxu0 0
        %2089 = vmatprep.subr.bf16.mxu0 0
        %2090 = vmatpush1.bf16.msra.mxu0 0
        %2091 = vmatprep.subr.bf16.mxu0 0
        %2092 = vmatpush1.bf16.msra.mxu0 0
        %2093 = vmatprep.subr.bf16.mxu0 0
        %2094 = vmatpush1.bf16.msra.mxu0 0
        %2095 = vmatprep.subr.bf16.mxu0 0
        %2096 = vmatpush1.bf16.msra.mxu0 0
        %2097 = vmatprep.mubr.bf16.mxu0 0
        %2098 = vmatmul.mubr.bf16.gmra.mrb[0].mxu0 %v1933
        %v2099 = vpop.f32.mrb[0].mxu0
        %v2100 = vadd.f32 %v1874, %v2099
        %v2101 = vpop.f32.mrb[0].mxu0
        %v2102 = vadd.f32 %v1874, %v2101
        %v2103 = vpop.f32.mrb[0].mxu0
        %v2104 = vadd.f32 %v1879, %v2103
        %v2105 = vpop.f32.mrb[0].mxu0
        %v2106 = vadd.f32 %v1879, %v2105
        %2107 = vmatprep.mubr.bf16.mxu0 0
        %2108 = vmatmul.mubr.bf16.gmra.mrb[0].mxu0 %v1936
        %v2109 = vpop.f32.mrb[0].mxu0
        %v2110 = vadd.f32 %v1884, %v2109
        %v2111 = vpop.f32.mrb[0].mxu0
        %v2112 = vadd.f32 %v1884, %v2111
        %v2113 = vpop.f32.mrb[0].mxu0
        %v2114 = vadd.f32 %v1889, %v2113
        %v2115 = vpop.f32.mrb[0].mxu0
        %v2116 = vadd.f32 %v1889, %v2115
        %2117 = vmatprep.mubr.bf16.mxu0 0
        %2118 = vmatmul.mubr.bf16.gmra.mrb[0].mxu0 %v1939
        %v2119 = vpop.f32.mrb[0].mxu0
        %v2120 = vadd.f32 %v1894, %v2119
        %v2121 = vpop.f32.mrb[0].mxu0
        %v2122 = vadd.f32 %v1894, %v2121
        %v2123 = vpop.f32.mrb[0].mxu0
        %v2124 = vadd.f32 %v1899, %v2123
        %v2125 = vpop.f32.mrb[0].mxu0
        %v2126 = vadd.f32 %v1899, %v2125
        %2127 = vmatprep.mubr.bf16.mxu0 0
        %2128 = vmatmul.mubr.bf16.gmra.mrb[0].mxu0 %v1942
        %v2129 = vpop.f32.mrb[0].mxu0
        %v2130 = vadd.f32 %v1904, %v2129
        %v2131 = vpop.f32.mrb[0].mxu0
        %v2132 = vadd.f32 %v1904, %v2131
        %v2133 = vpop.f32.mrb[0].mxu0
        %v2134 = vadd.f32 %v1909, %v2133
        %v2135 = vpop.f32.mrb[0].mxu0
        %v2136 = vadd.f32 %v1909, %v2135
        %2137 = vdwg.mxu0
        %2138 = vmatprep.subr.bf16.mxu0 %v1298
        %2139 = vmatpush1.bf16.msra.mxu0 %v1295
        %2140 = vmatprep.subr.bf16.mxu0 %v1426
        %2141 = vmatpush1.bf16.msra.mxu0 %v1423
        %2142 = vmatprep.subr.bf16.mxu0 %v1554
        %2143 = vmatpush1.bf16.msra.mxu0 %v1551
        %2144 = vmatprep.subr.bf16.mxu0 %v1682
        %2145 = vmatpush1.bf16.msra.mxu0 %v1679
        %2146 = vmatprep.subr.bf16.mxu0 %v1812
        %2147 = vmatpush1.bf16.msra.mxu0 %v1811
        %2148 = vmatprep.subr.bf16.mxu0 %v1960
        %2149 = vmatpush1.bf16.msra.mxu0 %v1957
        %2150 = vmatprep.subr.bf16.mxu0 0
        %2151 = vmatpush1.bf16.msra.mxu0 0
        %2152 = vmatprep.subr.bf16.mxu0 0
        %2153 = vmatpush1.bf16.msra.mxu0 0
        %2154 = vmatprep.subr.bf16.mxu0 0
        %2155 = vmatpush1.bf16.msra.mxu0 0
        %2156 = vmatprep.subr.bf16.mxu0 0
        %2157 = vmatpush1.bf16.msra.mxu0 0
        %2158 = vmatprep.subr.bf16.mxu0 0
        %2159 = vmatpush1.bf16.msra.mxu0 0
        %2160 = vmatprep.subr.bf16.mxu0 0
        %2161 = vmatpush1.bf16.msra.mxu0 0
        %2162 = vmatprep.subr.bf16.mxu0 0
        %2163 = vmatpush1.bf16.msra.mxu0 0
        %2164 = vmatprep.subr.bf16.mxu0 0
        %2165 = vmatpush1.bf16.msra.mxu0 0
        %2166 = vmatprep.subr.bf16.mxu0 0
        %2167 = vmatpush1.bf16.msra.mxu0 0
        %2168 = vmatprep.subr.bf16.mxu0 0
        %2169 = vmatpush1.bf16.msra.mxu0 0
        %2170 = vmatprep.mubr.bf16.mxu0 0
        %2171 = vmatmul.mubr.bf16.gmra.mrb[0].mxu0 %v1933
        %v2172 = vpop.f32.mrb[0].mxu0
        %v2173 = vadd.f32 %v1874, %v2172
        %v2174 = vpop.f32.mrb[0].mxu0
        %v2175 = vadd.f32 %v1874, %v2174
        %v2176 = vpop.f32.mrb[0].mxu0
        %v2177 = vadd.f32 %v1879, %v2176
        %v2178 = vpop.f32.mrb[0].mxu0
        %v2179 = vadd.f32 %v1879, %v2178
        %2180 = vmatprep.mubr.bf16.mxu0 0
        %2181 = vmatmul.mubr.bf16.gmra.mrb[0].mxu0 %v1936
        %v2182 = vpop.f32.mrb[0].mxu0
        %v2183 = vadd.f32 %v1884, %v2182
        %v2184 = vpop.f32.mrb[0].mxu0
        %v2185 = vadd.f32 %v1884, %v2184
        %v2186 = vpop.f32.mrb[0].mxu0
        %v2187 = vadd.f32 %v1889, %v2186
        %v2188 = vpop.f32.mrb[0].mxu0
        %v2189 = vadd.f32 %v1889, %v2188
        %2190 = vmatprep.mubr.bf16.mxu0 0
        %2191 = vmatmul.mubr.bf16.gmra.mrb[0].mxu0 %v1939
        %v2192 = vpop.f32.mrb[0].mxu0
        %v2193 = vadd.f32 %v1894, %v2192
        %v2194 = vpop.f32.mrb[0].mxu0
        %v2195 = vadd.f32 %v1894, %v2194
        %v2196 = vpop.f32.mrb[0].mxu0
        %v2197 = vadd.f32 %v1899, %v2196
        %v2198 = vpop.f32.mrb[0].mxu0
        %v2199 = vadd.f32 %v1899, %v2198
        %2200 = vmatprep.mubr.bf16.mxu0 0
        %2201 = vmatmul.mubr.bf16.gmra.mrb[0].mxu0 %v1942
        %v2202 = vpop.f32.mrb[0].mxu0
        %v2203 = vadd.f32 %v1904, %v2202
        %v2204 = vpop.f32.mrb[0].mxu0
        %v2205 = vadd.f32 %v1904, %v2204
        %v2206 = vpop.f32.mrb[0].mxu0
        %v2207 = vadd.f32 %v1909, %v2206
        %v2208 = vpop.f32.mrb[0].mxu0
        %v2209 = vadd.f32 %v1909, %v2208
        %2210 = vdwg.mxu0
        %2211 = vmatprep.subr.bf16.mxu0 %v1304
        %2212 = vmatpush1.bf16.msra.mxu0 %v1301
        %2213 = vmatprep.subr.bf16.mxu0 %v1432
        %2214 = vmatpush1.bf16.msra.mxu0 %v1429
        %2215 = vmatprep.subr.bf16.mxu0 %v1560
        %2216 = vmatpush1.bf16.msra.mxu0 %v1557
        %2217 = vmatprep.subr.bf16.mxu0 %v1688
        %2218 = vmatpush1.bf16.msra.mxu0 %v1685
        %2219 = vmatprep.subr.bf16.mxu0 %v1814
        %2220 = vmatpush1.bf16.msra.mxu0 %v1813
        %2221 = vmatprep.subr.bf16.mxu0 %v1966
        %2222 = vmatpush1.bf16.msra.mxu0 %v1963
        %2223 = vmatprep.subr.bf16.mxu0 0
        %2224 = vmatpush1.bf16.msra.mxu0 0
        %2225 = vmatprep.subr.bf16.mxu0 0
        %2226 = vmatpush1.bf16.msra.mxu0 0
        %2227 = vmatprep.subr.bf16.mxu0 0
        %2228 = vmatpush1.bf16.msra.mxu0 0
        %2229 = vmatprep.subr.bf16.mxu0 0
        %2230 = vmatpush1.bf16.msra.mxu0 0
        %2231 = vmatprep.subr.bf16.mxu0 0
        %2232 = vmatpush1.bf16.msra.mxu0 0
        %2233 = vmatprep.subr.bf16.mxu0 0
        %2234 = vmatpush1.bf16.msra.mxu0 0
        %2235 = vmatprep.subr.bf16.mxu0 0
        %2236 = vmatpush1.bf16.msra.mxu0 0
        %2237 = vmatprep.subr.bf16.mxu0 0
        %2238 = vmatpush1.bf16.msra.mxu0 0
        %2239 = vmatprep.subr.bf16.mxu0 0
        %2240 = vmatpush1.bf16.msra.mxu0 0
        %2241 = vmatprep.subr.bf16.mxu0 0
        %2242 = vmatpush1.bf16.msra.mxu0 0
        %2243 = vmatprep.mubr.bf16.mxu0 0
        %2244 = vmatmul.mubr.bf16.gmra.mrb[0].mxu0 %v1933
        %v2245 = vpop.f32.mrb[0].mxu0
        %v2246 = vadd.f32 %v1874, %v2245
        %v2247 = vpop.f32.mrb[0].mxu0
        %v2248 = vadd.f32 %v1874, %v2247
        %v2249 = vpop.f32.mrb[0].mxu0
        %v2250 = vadd.f32 %v1879, %v2249
        %v2251 = vpop.f32.mrb[0].mxu0
        %v2252 = vadd.f32 %v1879, %v2251
        %2253 = vmatprep.mubr.bf16.mxu0 0
        %2254 = vmatmul.mubr.bf16.gmra.mrb[0].mxu0 %v1936
        %v2255 = vpop.f32.mrb[0].mxu0
        %v2256 = vadd.f32 %v1884, %v2255
        %v2257 = vpop.f32.mrb[0].mxu0
        %v2258 = vadd.f32 %v1884, %v2257
        %v2259 = vpop.f32.mrb[0].mxu0
        %v2260 = vadd.f32 %v1889, %v2259
        %v2261 = vpop.f32.mrb[0].mxu0
        %v2262 = vadd.f32 %v1889, %v2261
        %2263 = vmatprep.mubr.bf16.mxu0 0
        %2264 = vmatmul.mubr.bf16.gmra.mrb[0].mxu0 %v1939
        %v2265 = vpop.f32.mrb[0].mxu0
        %v2266 = vadd.f32 %v1894, %v2265
        %v2267 = vpop.f32.mrb[0].mxu0
        %v2268 = vadd.f32 %v1894, %v2267
        %v2269 = vpop.f32.mrb[0].mxu0
        %v2270 = vadd.f32 %v1899, %v2269
        %v2271 = vpop.f32.mrb[0].mxu0
        %v2272 = vadd.f32 %v1899, %v2271
        %2273 = vmatprep.mubr.bf16.mxu0 0
        %2274 = vmatmul.mubr.bf16.gmra.mrb[0].mxu0 %v1942
        %v2275 = vpop.f32.mrb[0].mxu0
        %v2276 = vadd.f32 %v1904, %v2275
        %v2277 = vpop.f32.mrb[0].mxu0
        %v2278 = vadd.f32 %v1904, %v2277
        %v2279 = vpop.f32.mrb[0].mxu0
        %v2280 = vadd.f32 %v1909, %v2279
        %v2281 = vpop.f32.mrb[0].mxu0
        %v2282 = vadd.f32 %v1909, %v2281
        %2283 = vdwg.mxu0
        %2284 = vmatprep.subr.bf16.mxu0 %v1310
        %2285 = vmatpush1.bf16.msra.mxu0 %v1307
        %2286 = vmatprep.subr.bf16.mxu0 %v1438
        %2287 = vmatpush1.bf16.msra.mxu0 %v1435
        %2288 = vmatprep.subr.bf16.mxu0 %v1566
        %2289 = vmatpush1.bf16.msra.mxu0 %v1563
        %2290 = vmatprep.subr.bf16.mxu0 %v1694
        %2291 = vmatpush1.bf16.msra.mxu0 %v1691
        %2292 = vmatprep.subr.bf16.mxu0 %v1816
        %2293 = vmatpush1.bf16.msra.mxu0 %v1815
        %2294 = vmatprep.subr.bf16.mxu0 %v1972
        %2295 = vmatpush1.bf16.msra.mxu0 %v1969
        %2296 = vmatprep.subr.bf16.mxu0 0
        %2297 = vmatpush1.bf16.msra.mxu0 0
        %2298 = vmatprep.subr.bf16.mxu0 0
        %2299 = vmatpush1.bf16.msra.mxu0 0
        %2300 = vmatprep.subr.bf16.mxu0 0
        %2301 = vmatpush1.bf16.msra.mxu0 0
        %2302 = vmatprep.subr.bf16.mxu0 0
        %2303 = vmatpush1.bf16.msra.mxu0 0
        %2304 = vmatprep.subr.bf16.mxu0 0
        %2305 = vmatpush1.bf16.msra.mxu0 0
        %2306 = vmatprep.subr.bf16.mxu0 0
        %2307 = vmatpush1.bf16.msra.mxu0 0
        %2308 = vmatprep.subr.bf16.mxu0 0
        %2309 = vmatpush1.bf16.msra.mxu0 0
        %2310 = vmatprep.subr.bf16.mxu0 0
        %2311 = vmatpush1.bf16.msra.mxu0 0
        %2312 = vmatprep.subr.bf16.mxu0 0
        %2313 = vmatpush1.bf16.msra.mxu0 0
        %2314 = vmatprep.subr.bf16.mxu0 0
        %2315 = vmatpush1.bf16.msra.mxu0 0
        %2316 = vmatprep.mubr.bf16.mxu0 0
        %2317 = vmatmul.mubr.bf16.gmra.mrb[0].mxu0 %v1933
        %v2318 = vpop.f32.mrb[0].mxu0
        %v2319 = vadd.f32 %v1874, %v2318
        %v2320 = vpop.f32.mrb[0].mxu0
        %v2321 = vadd.f32 %v1874, %v2320
        %v2322 = vpop.f32.mrb[0].mxu0
        %v2323 = vadd.f32 %v1879, %v2322
        %v2324 = vpop.f32.mrb[0].mxu0
        %v2325 = vadd.f32 %v1879, %v2324
        %2326 = vmatprep.mubr.bf16.mxu0 0
        %2327 = vmatmul.mubr.bf16.gmra.mrb[0].mxu0 %v1936
        %v2328 = vpop.f32.mrb[0].mxu0
        %v2329 = vadd.f32 %v1884, %v2328
        %v2330 = vpop.f32.mrb[0].mxu0
        %v2331 = vadd.f32 %v1884, %v2330
        %v2332 = vpop.f32.mrb[0].mxu0
        %v2333 = vadd.f32 %v1889, %v2332
        %v2334 = vpop.f32.mrb[0].mxu0
        %v2335 = vadd.f32 %v1889, %v2334
        %2336 = vmatprep.mubr.bf16.mxu0 0
        %2337 = vmatmul.mubr.bf16.gmra.mrb[0].mxu0 %v1939
        %v2338 = vpop.f32.mrb[0].mxu0
        %v2339 = vadd.f32 %v1894, %v2338
        %v2340 = vpop.f32.mrb[0].mxu0
        %v2341 = vadd.f32 %v1894, %v2340
        %v2342 = vpop.f32.mrb[0].mxu0
        %v2343 = vadd.f32 %v1899, %v2342
        %v2344 = vpop.f32.mrb[0].mxu0
        %v2345 = vadd.f32 %v1899, %v2344
        %2346 = vmatprep.mubr.bf16.mxu0 0
        %2347 = vmatmul.mubr.bf16.gmra.mrb[0].mxu0 %v1942
        %v2348 = vpop.f32.mrb[0].mxu0
        %v2349 = vadd.f32 %v1904, %v2348
        %v2350 = vpop.f32.mrb[0].mxu0
        %v2351 = vadd.f32 %v1904, %v2350
        %v2352 = vpop.f32.mrb[0].mxu0
        %v2353 = vadd.f32 %v1909, %v2352
        %v2354 = vpop.f32.mrb[0].mxu0
        %v2355 = vadd.f32 %v1909, %v2354
        %2356 = vdwg.mxu0
        %2357 = vmatprep.subr.bf16.mxu0 %v1316
        %2358 = vmatpush1.bf16.msra.mxu0 %v1313
        %2359 = vmatprep.subr.bf16.mxu0 %v1444
        %2360 = vmatpush1.bf16.msra.mxu0 %v1441
        %2361 = vmatprep.subr.bf16.mxu0 %v1572
        %2362 = vmatpush1.bf16.msra.mxu0 %v1569
        %2363 = vmatprep.subr.bf16.mxu0 %v1700
        %2364 = vmatpush1.bf16.msra.mxu0 %v1697
        %2365 = vmatprep.subr.bf16.mxu0 %v1818
        %2366 = vmatpush1.bf16.msra.mxu0 %v1817
        %2367 = vmatprep.subr.bf16.mxu0 %v1978
        %2368 = vmatpush1.bf16.msra.mxu0 %v1975
        %2369 = vmatprep.subr.bf16.mxu0 0
        %2370 = vmatpush1.bf16.msra.mxu0 0
        %2371 = vmatprep.subr.bf16.mxu0 0
        %2372 = vmatpush1.bf16.msra.mxu0 0
        %2373 = vmatprep.subr.bf16.mxu0 0
        %2374 = vmatpush1.bf16.msra.mxu0 0
        %2375 = vmatprep.subr.bf16.mxu0 0
        %2376 = vmatpush1.bf16.msra.mxu0 0
        %2377 = vmatprep.subr.bf16.mxu0 0
        %2378 = vmatpush1.bf16.msra.mxu0 0
        %2379 = vmatprep.subr.bf16.mxu0 0
        %2380 = vmatpush1.bf16.msra.mxu0 0
        %2381 = vmatprep.subr.bf16.mxu0 0
        %2382 = vmatpush1.bf16.msra.mxu0 0
        %2383 = vmatprep.subr.bf16.mxu0 0
        %2384 = vmatpush1.bf16.msra.mxu0 0
        %2385 = vmatprep.subr.bf16.mxu0 0
        %2386 = vmatpush1.bf16.msra.mxu0 0
        %2387 = vmatprep.subr.bf16.mxu0 0
        %2388 = vmatpush1.bf16.msra.mxu0 0
        %2389 = vmatprep.mubr.bf16.mxu0 0
        %2390 = vmatmul.mubr.bf16.gmra.mrb[0].mxu0 %v1933
        %v2391 = vpop.f32.mrb[0].mxu0
        %v2392 = vadd.f32 %v1874, %v2391
        %v2393 = vpop.f32.mrb[0].mxu0
        %v2394 = vadd.f32 %v1874, %v2393
        %v2395 = vpop.f32.mrb[0].mxu0
        %v2396 = vadd.f32 %v1879, %v2395
        %v2397 = vpop.f32.mrb[0].mxu0
        %v2398 = vadd.f32 %v1879, %v2397
        %2399 = vmatprep.mubr.bf16.mxu0 0
        %2400 = vmatmul.mubr.bf16.gmra.mrb[0].mxu0 %v1936
        %v2401 = vpop.f32.mrb[0].mxu0
        %v2402 = vadd.f32 %v1884, %v2401
        %v2403 = vpop.f32.mrb[0].mxu0
        %v2404 = vadd.f32 %v1884, %v2403
        %v2405 = vpop.f32.mrb[0].mxu0
        %v2406 = vadd.f32 %v1889, %v2405
        %v2407 = vpop.f32.mrb[0].mxu0
        %v2408 = vadd.f32 %v1889, %v2407
        %2409 = vmatprep.mubr.bf16.mxu0 0
        %2410 = vmatmul.mubr.bf16.gmra.mrb[0].mxu0 %v1939
        %v2411 = vpop.f32.mrb[0].mxu0
        %v2412 = vadd.f32 %v1894, %v2411
        %v2413 = vpop.f32.mrb[0].mxu0
        %v2414 = vadd.f32 %v1894, %v2413
        %v2415 = vpop.f32.mrb[0].mxu0
        %v2416 = vadd.f32 %v1899, %v2415
        %v2417 = vpop.f32.mrb[0].mxu0
        %v2418 = vadd.f32 %v1899, %v2417
        %2419 = vmatprep.mubr.bf16.mxu0 0
        %2420 = vmatmul.mubr.bf16.gmra.mrb[0].mxu0 %v1942
        %v2421 = vpop.f32.mrb[0].mxu0
        %v2422 = vadd.f32 %v1904, %v2421
        %v2423 = vpop.f32.mrb[0].mxu0
        %v2424 = vadd.f32 %v1904, %v2423
        %v2425 = vpop.f32.mrb[0].mxu0
        %v2426 = vadd.f32 %v1909, %v2425
        %v2427 = vpop.f32.mrb[0].mxu0
        %v2428 = vadd.f32 %v1909, %v2427
        %2429 = vdwg.mxu0
        %2430 = vmatprep.subr.bf16.mxu0 %v1322
        %2431 = vmatpush1.bf16.msra.mxu0 %v1319
        %2432 = vmatprep.subr.bf16.mxu0 %v1450
        %2433 = vmatpush1.bf16.msra.mxu0 %v1447
        %2434 = vmatprep.subr.bf16.mxu0 %v1578
        %2435 = vmatpush1.bf16.msra.mxu0 %v1575
        %2436 = vmatprep.subr.bf16.mxu0 %v1706
        %2437 = vmatpush1.bf16.msra.mxu0 %v1703
        %2438 = vmatprep.subr.bf16.mxu0 %v1820
        %2439 = vmatpush1.bf16.msra.mxu0 %v1819
        %2440 = vmatprep.subr.bf16.mxu0 %v1984
        %2441 = vmatpush1.bf16.msra.mxu0 %v1981
        %2442 = vmatprep.subr.bf16.mxu0 0
        %2443 = vmatpush1.bf16.msra.mxu0 0
        %2444 = vmatprep.subr.bf16.mxu0 0
        %2445 = vmatpush1.bf16.msra.mxu0 0
        %2446 = vmatprep.subr.bf16.mxu0 0
        %2447 = vmatpush1.bf16.msra.mxu0 0
        %2448 = vmatprep.subr.bf16.mxu0 0
        %2449 = vmatpush1.bf16.msra.mxu0 0
        %2450 = vmatprep.subr.bf16.mxu0 0
        %2451 = vmatpush1.bf16.msra.mxu0 0
        %2452 = vmatprep.subr.bf16.mxu0 0
        %2453 = vmatpush1.bf16.msra.mxu0 0
        %2454 = vmatprep.subr.bf16.mxu0 0
        %2455 = vmatpush1.bf16.msra.mxu0 0
        %2456 = vmatprep.subr.bf16.mxu0 0
        %2457 = vmatpush1.bf16.msra.mxu0 0
        %2458 = vmatprep.subr.bf16.mxu0 0
        %2459 = vmatpush1.bf16.msra.mxu0 0
        %2460 = vmatprep.subr.bf16.mxu0 0
        %2461 = vmatpush1.bf16.msra.mxu0 0
        %2462 = vmatprep.mubr.bf16.mxu0 0
        %2463 = vmatmul.mubr.bf16.gmra.mrb[0].mxu0 %v1933
        %v2464 = vpop.f32.mrb[0].mxu0
        %v2465 = vadd.f32 %v1874, %v2464
        %v2466 = vpop.f32.mrb[0].mxu0
        %v2467 = vadd.f32 %v1874, %v2466
        %v2468 = vpop.f32.mrb[0].mxu0
        %v2469 = vadd.f32 %v1879, %v2468
        %v2470 = vpop.f32.mrb[0].mxu0
        %v2471 = vadd.f32 %v1879, %v2470
        %2472 = vmatprep.mubr.bf16.mxu0 0
        %2473 = vmatmul.mubr.bf16.gmra.mrb[0].mxu0 %v1936
        %v2474 = vpop.f32.mrb[0].mxu0
        %v2475 = vadd.f32 %v1884, %v2474
        %v2476 = vpop.f32.mrb[0].mxu0
        %v2477 = vadd.f32 %v1884, %v2476
        %v2478 = vpop.f32.mrb[0].mxu0
        %v2479 = vadd.f32 %v1889, %v2478
        %v2480 = vpop.f32.mrb[0].mxu0
        %v2481 = vadd.f32 %v1889, %v2480
        %2482 = vmatprep.mubr.bf16.mxu0 0
        %2483 = vmatmul.mubr.bf16.gmra.mrb[0].mxu0 %v1939
        %v2484 = vpop.f32.mrb[0].mxu0
        %v2485 = vadd.f32 %v1894, %v2484
        %v2486 = vpop.f32.mrb[0].mxu0
        %v2487 = vadd.f32 %v1894, %v2486
        %v2488 = vpop.f32.mrb[0].mxu0
        %v2489 = vadd.f32 %v1899, %v2488
        %v2490 = vpop.f32.mrb[0].mxu0
        %v2491 = vadd.f32 %v1899, %v2490
        %2492 = vmatprep.mubr.bf16.mxu0 0
        %2493 = vmatmul.mubr.bf16.gmra.mrb[0].mxu0 %v1942
        %v2494 = vpop.f32.mrb[0].mxu0
        %v2495 = vadd.f32 %v1904, %v2494
        %v2496 = vpop.f32.mrb[0].mxu0
        %v2497 = vadd.f32 %v1904, %v2496
        %v2498 = vpop.f32.mrb[0].mxu0
        %v2499 = vadd.f32 %v1909, %v2498
        %v2500 = vpop.f32.mrb[0].mxu0
        %v2501 = vadd.f32 %v1909, %v2500
        %2502 = vdwg.mxu0
        %2503 = vmatprep.subr.bf16.mxu0 %v1328
        %2504 = vmatpush1.bf16.msra.mxu0 %v1325
        %2505 = vmatprep.subr.bf16.mxu0 %v1456
        %2506 = vmatpush1.bf16.msra.mxu0 %v1453
        %2507 = vmatprep.subr.bf16.mxu0 %v1584
        %2508 = vmatpush1.bf16.msra.mxu0 %v1581
        %2509 = vmatprep.subr.bf16.mxu0 %v1712
        %2510 = vmatpush1.bf16.msra.mxu0 %v1709
        %2511 = vmatprep.subr.bf16.mxu0 %v1822
        %2512 = vmatpush1.bf16.msra.mxu0 %v1821
        %2513 = vmatprep.subr.bf16.mxu0 %v1990
        %2514 = vmatpush1.bf16.msra.mxu0 %v1987
        %2515 = vmatprep.subr.bf16.mxu0 0
        %2516 = vmatpush1.bf16.msra.mxu0 0
        %2517 = vmatprep.subr.bf16.mxu0 0
        %2518 = vmatpush1.bf16.msra.mxu0 0
        %2519 = vmatprep.subr.bf16.mxu0 0
        %2520 = vmatpush1.bf16.msra.mxu0 0
        %2521 = vmatprep.subr.bf16.mxu0 0
        %2522 = vmatpush1.bf16.msra.mxu0 0
        %2523 = vmatprep.subr.bf16.mxu0 0
        %2524 = vmatpush1.bf16.msra.mxu0 0
        %2525 = vmatprep.subr.bf16.mxu0 0
        %2526 = vmatpush1.bf16.msra.mxu0 0
        %2527 = vmatprep.subr.bf16.mxu0 0
        %2528 = vmatpush1.bf16.msra.mxu0 0
        %2529 = vmatprep.subr.bf16.mxu0 0
        %2530 = vmatpush1.bf16.msra.mxu0 0
        %2531 = vmatprep.subr.bf16.mxu0 0
        %2532 = vmatpush1.bf16.msra.mxu0 0
        %2533 = vmatprep.subr.bf16.mxu0 0
        %2534 = vmatpush1.bf16.msra.mxu0 0
        %2535 = vmatprep.mubr.bf16.mxu0 0
        %2536 = vmatmul.mubr.bf16.gmra.mrb[0].mxu0 %v1933
        %v2537 = vpop.f32.mrb[0].mxu0
        %v2538 = vadd.f32 %v1874, %v2537
        %v2539 = vpop.f32.mrb[0].mxu0
        %v2540 = vadd.f32 %v1874, %v2539
        %v2541 = vpop.f32.mrb[0].mxu0
        %v2542 = vadd.f32 %v1879, %v2541
        %v2543 = vpop.f32.mrb[0].mxu0
        %v2544 = vadd.f32 %v1879, %v2543
        %2545 = vmatprep.mubr.bf16.mxu0 0
        %2546 = vmatmul.mubr.bf16.gmra.mrb[0].mxu0 %v1936
        %v2547 = vpop.f32.mrb[0].mxu0
        %v2548 = vadd.f32 %v1884, %v2547
        %v2549 = vpop.f32.mrb[0].mxu0
        %v2550 = vadd.f32 %v1884, %v2549
        %v2551 = vpop.f32.mrb[0].mxu0
        %v2552 = vadd.f32 %v1889, %v2551
        %v2553 = vpop.f32.mrb[0].mxu0
        %v2554 = vadd.f32 %v1889, %v2553
        %2555 = vmatprep.mubr.bf16.mxu0 0
        %2556 = vmatmul.mubr.bf16.gmra.mrb[0].mxu0 %v1939
        %v2557 = vpop.f32.mrb[0].mxu0
        %v2558 = vadd.f32 %v1894, %v2557
        %v2559 = vpop.f32.mrb[0].mxu0
        %v2560 = vadd.f32 %v1894, %v2559
        %v2561 = vpop.f32.mrb[0].mxu0
        %v2562 = vadd.f32 %v1899, %v2561
        %v2563 = vpop.f32.mrb[0].mxu0
        %v2564 = vadd.f32 %v1899, %v2563
        %2565 = vmatprep.mubr.bf16.mxu0 0
        %2566 = vmatmul.mubr.bf16.gmra.mrb[0].mxu0 %v1942
        %v2567 = vpop.f32.mrb[0].mxu0
        %v2568 = vadd.f32 %v1904, %v2567
        %v2569 = vpop.f32.mrb[0].mxu0
        %v2570 = vadd.f32 %v1904, %v2569
        %v2571 = vpop.f32.mrb[0].mxu0
        %v2572 = vadd.f32 %v1909, %v2571
        %v2573 = vpop.f32.mrb[0].mxu0
        %v2574 = vadd.f32 %v1909, %v2573
        %2575 = vdwg.mxu0
        %v2576 = vmax.f32 %v2027, 0.0
        %v2577 = vmax.f32 %v2029, 0.0
        %v2578 = vmax.f32 %v2100, 0.0
        %v2579 = vmax.f32 %v2102, 0.0
        %v2580 = vmax.f32 %v2173, 0.0
        %v2581 = vmax.f32 %v2175, 0.0
        %v2582 = vmax.f32 %v2246, 0.0
        %v2583 = vmax.f32 %v2248, 0.0
        %v2584 = vmax.f32 %v2319, 0.0
        %v2585 = vmax.f32 %v2321, 0.0
        %v2586 = vmax.f32 %v2392, 0.0
        %v2587 = vmax.f32 %v2394, 0.0
        %v2588 = vmax.f32 %v2465, 0.0
        %v2589 = vmax.f32 %v2467, 0.0
        %v2590 = vmax.f32 %v2538, 0.0
        %v2591 = vmax.f32 %v2540, 0.0
        %v2592 = vmax.f32 %v2031, 0.0
        %v2593 = vmax.f32 %v2033, 0.0
        %v2594 = vmax.f32 %v2104, 0.0
        %v2595 = vmax.f32 %v2106, 0.0
        %v2596 = vmax.f32 %v2177, 0.0
        %v2597 = vmax.f32 %v2179, 0.0
        %v2598 = vmax.f32 %v2250, 0.0
        %v2599 = vmax.f32 %v2252, 0.0
        %v2600 = vmax.f32 %v2323, 0.0
        %v2601 = vmax.f32 %v2325, 0.0
        %v2602 = vmax.f32 %v2396, 0.0
        %v2603 = vmax.f32 %v2398, 0.0
        %v2604 = vmax.f32 %v2469, 0.0
        %v2605 = vmax.f32 %v2471, 0.0
        %v2606 = vmax.f32 %v2542, 0.0
        %v2607 = vmax.f32 %v2544, 0.0
        %v2608 = vmax.f32 %v2037, 0.0
        %v2609 = vmax.f32 %v2039, 0.0
        %v2610 = vmax.f32 %v2110, 0.0
        %v2611 = vmax.f32 %v2112, 0.0
        %v2612 = vmax.f32 %v2183, 0.0
        %v2613 = vmax.f32 %v2185, 0.0
        %v2614 = vmax.f32 %v2256, 0.0
        %v2615 = vmax.f32 %v2258, 0.0
        %v2616 = vmax.f32 %v2329, 0.0
        %v2617 = vmax.f32 %v2331, 0.0
        %v2618 = vmax.f32 %v2402, 0.0
        %v2619 = vmax.f32 %v2404, 0.0
        %v2620 = vmax.f32 %v2475, 0.0
        %v2621 = vmax.f32 %v2477, 0.0
        %v2622 = vmax.f32 %v2548, 0.0
        %v2623 = vmax.f32 %v2550, 0.0
        %v2624 = vmax.f32 %v2041, 0.0
        %v2625 = vmax.f32 %v2043, 0.0
        %v2626 = vmax.f32 %v2114, 0.0
        %v2627 = vmax.f32 %v2116, 0.0
        %v2628 = vmax.f32 %v2187, 0.0
        %v2629 = vmax.f32 %v2189, 0.0
        %v2630 = vmax.f32 %v2260, 0.0
        %v2631 = vmax.f32 %v2262, 0.0
        %v2632 = vmax.f32 %v2333, 0.0
        %v2633 = vmax.f32 %v2335, 0.0
        %v2634 = vmax.f32 %v2406, 0.0
        %v2635 = vmax.f32 %v2408, 0.0
        %v2636 = vmax.f32 %v2479, 0.0
        %v2637 = vmax.f32 %v2481, 0.0
        %v2638 = vmax.f32 %v2552, 0.0
        %v2639 = vmax.f32 %v2554, 0.0
        %v2640 = vmax.f32 %v2047, 0.0
        %v2641 = vmax.f32 %v2049, 0.0
        %v2642 = vmax.f32 %v2120, 0.0
        %v2643 = vmax.f32 %v2122, 0.0
        %v2644 = vmax.f32 %v2193, 0.0
        %v2645 = vmax.f32 %v2195, 0.0
        %v2646 = vmax.f32 %v2266, 0.0
        %v2647 = vmax.f32 %v2268, 0.0
        %v2648 = vmax.f32 %v2339, 0.0
        %v2649 = vmax.f32 %v2341, 0.0
        %v2650 = vmax.f32 %v2412, 0.0
        %v2651 = vmax.f32 %v2414, 0.0
        %v2652 = vmax.f32 %v2485, 0.0
        %v2653 = vmax.f32 %v2487, 0.0
        %v2654 = vmax.f32 %v2558, 0.0
        %v2655 = vmax.f32 %v2560, 0.0
        %v2656 = vmax.f32 %v2051, 0.0
        %v2657 = vmax.f32 %v2053, 0.0
        %v2658 = vmax.f32 %v2124, 0.0
        %v2659 = vmax.f32 %v2126, 0.0
        %v2660 = vmax.f32 %v2197, 0.0
        %v2661 = vmax.f32 %v2199, 0.0
        %v2662 = vmax.f32 %v2270, 0.0
        %v2663 = vmax.f32 %v2272, 0.0
        %v2664 = vmax.f32 %v2343, 0.0
        %v2665 = vmax.f32 %v2345, 0.0
        %v2666 = vmax.f32 %v2416, 0.0
        %v2667 = vmax.f32 %v2418, 0.0
        %v2668 = vmax.f32 %v2489, 0.0
        %v2669 = vmax.f32 %v2491, 0.0
        %v2670 = vmax.f32 %v2562, 0.0
        %v2671 = vmax.f32 %v2564, 0.0
        %v2672 = vmax.f32 %v2057, 0.0
        %v2673 = vmax.f32 %v2059, 0.0
        %v2674 = vmax.f32 %v2130, 0.0
        %v2675 = vmax.f32 %v2132, 0.0
        %v2676 = vmax.f32 %v2203, 0.0
        %v2677 = vmax.f32 %v2205, 0.0
        %v2678 = vmax.f32 %v2276, 0.0
        %v2679 = vmax.f32 %v2278, 0.0
        %v2680 = vmax.f32 %v2349, 0.0
        %v2681 = vmax.f32 %v2351, 0.0
        %v2682 = vmax.f32 %v2422, 0.0
        %v2683 = vmax.f32 %v2424, 0.0
        %v2684 = vmax.f32 %v2495, 0.0
        %v2685 = vmax.f32 %v2497, 0.0
        %v2686 = vmax.f32 %v2568, 0.0
        %v2687 = vmax.f32 %v2570, 0.0
        %v2688 = vmax.f32 %v2061, 0.0
        %v2689 = vmax.f32 %v2063, 0.0
        %v2690 = vmax.f32 %v2134, 0.0
        %v2691 = vmax.f32 %v2136, 0.0
        %v2692 = vmax.f32 %v2207, 0.0
        %v2693 = vmax.f32 %v2209, 0.0
        %v2694 = vmax.f32 %v2280, 0.0
        %v2695 = vmax.f32 %v2282, 0.0
        %v2696 = vmax.f32 %v2353, 0.0
        %v2697 = vmax.f32 %v2355, 0.0
        %v2698 = vmax.f32 %v2426, 0.0
        %v2699 = vmax.f32 %v2428, 0.0
        %v2700 = vmax.f32 %v2499, 0.0
        %v2701 = vmax.f32 %v2501, 0.0
        %v2702 = vmax.f32 %v2572, 0.0
        %v2703 = vmax.f32 %v2574, 0.0
        %2704 = vst [vmem:[%s285] sm:$0xff] %v2576
        %2705 = vst [vmem:[%s285 + $0x8] sm:$0xff] %v2577
        %2706 = vst [vmem:[%s285 + $0x10] sm:$0xff] %v2578
        %2707 = vst [vmem:[%s285 + $0x18] sm:$0xff] %v2579
        %2708 = vst [vmem:[%s285 + $0x20] sm:$0xff] %v2580
        %2709 = vst [vmem:[%s285 + $0x28] sm:$0xff] %v2581
        %2710 = vst [vmem:[%s285 + $0x30] sm:$0xff] %v2582
        %2711 = vst [vmem:[%s285 + $0x38] sm:$0xff] %v2583
        %2712 = vst [vmem:[%s285 + $0x40] sm:$0xff] %v2584
        %2713 = vst [vmem:[%s285 + $0x48] sm:$0xff] %v2585
        %2714 = vst [vmem:[%s285 + $0x50] sm:$0xff] %v2586
        %2715 = vst [vmem:[%s285 + $0x58] sm:$0xff] %v2587
        %2716 = vst [vmem:[%s285 + $0x60] sm:$0xff] %v2588
        %2717 = vst [vmem:[%s285 + $0x68] sm:$0xff] %v2589
        %2718 = vst [vmem:[%s285 + $0x70] sm:$0xff] %v2590
        %2719 = vst [vmem:[%s285 + $0x78] sm:$0xff] %v2591
        %2720 = vst [vmem:[%s285 + $0x80] sm:$0xff] %v2592
        %2721 = vst [vmem:[%s285 + $0x88] sm:$0xff] %v2593
        %2722 = vst [vmem:[%s285 + $0x90] sm:$0xff] %v2594
        %2723 = vst [vmem:[%s285 + $0x98] sm:$0xff] %v2595
        %2724 = vst [vmem:[%s285 + $0xa0] sm:$0xff] %v2596
        %2725 = vst [vmem:[%s285 + $0xa8] sm:$0xff] %v2597
        %2726 = vst [vmem:[%s285 + $0xb0] sm:$0xff] %v2598
        %2727 = vst [vmem:[%s285 + $0xb8] sm:$0xff] %v2599
        %2728 = vst [vmem:[%s285 + $0xc0] sm:$0xff] %v2600
        %2729 = vst [vmem:[%s285 + $0xc8] sm:$0xff] %v2601
        %2730 = vst [vmem:[%s285 + $0xd0] sm:$0xff] %v2602
        %2731 = vst [vmem:[%s285 + $0xd8] sm:$0xff] %v2603
        %2732 = vst [vmem:[%s285 + $0xe0] sm:$0xff] %v2604
        %2733 = vst [vmem:[%s285 + $0xe8] sm:$0xff] %v2605
        %2734 = vst [vmem:[%s285 + $0xf0] sm:$0xff] %v2606
        %2735 = vst [vmem:[%s285 + $0xf8] sm:$0xff] %v2607
        %2736 = vst [vmem:[%s285 + $0x100] sm:$0xff] %v2608
        %2737 = vst [vmem:[%s285 + $0x108] sm:$0xff] %v2609
        %2738 = vst [vmem:[%s285 + $0x110] sm:$0xff] %v2610
        %2739 = vst [vmem:[%s285 + $0x118] sm:$0xff] %v2611
        %2740 = vst [vmem:[%s285 + $0x120] sm:$0xff] %v2612
        %2741 = vst [vmem:[%s285 + $0x128] sm:$0xff] %v2613
        %2742 = vst [vmem:[%s285 + $0x130] sm:$0xff] %v2614
        %2743 = vst [vmem:[%s285 + $0x138] sm:$0xff] %v2615
        %2744 = vst [vmem:[%s285 + $0x140] sm:$0xff] %v2616
        %2745 = vst [vmem:[%s285 + $0x148] sm:$0xff] %v2617
        %2746 = vst [vmem:[%s285 + $0x150] sm:$0xff] %v2618
        %2747 = vst [vmem:[%s285 + $0x158] sm:$0xff] %v2619
        %2748 = vst [vmem:[%s285 + $0x160] sm:$0xff] %v2620
        %2749 = vst [vmem:[%s285 + $0x168] sm:$0xff] %v2621
        %2750 = vst [vmem:[%s285 + $0x170] sm:$0xff] %v2622
        %2751 = vst [vmem:[%s285 + $0x178] sm:$0xff] %v2623
        %2752 = vst [vmem:[%s285 + $0x180] sm:$0xff] %v2624
        %2753 = vst [vmem:[%s285 + $0x188] sm:$0xff] %v2625
        %2754 = vst [vmem:[%s285 + $0x190] sm:$0xff] %v2626
        %2755 = vst [vmem:[%s285 + $0x198] sm:$0xff] %v2627
        %2756 = vst [vmem:[%s285 + $0x1a0] sm:$0xff] %v2628
        %2757 = vst [vmem:[%s285 + $0x1a8] sm:$0xff] %v2629
        %2758 = vst [vmem:[%s285 + $0x1b0] sm:$0xff] %v2630
        %2759 = vst [vmem:[%s285 + $0x1b8] sm:$0xff] %v2631
        %2760 = vst [vmem:[%s285 + $0x1c0] sm:$0xff] %v2632
        %2761 = vst [vmem:[%s285 + $0x1c8] sm:$0xff] %v2633
        %2762 = vst [vmem:[%s285 + $0x1d0] sm:$0xff] %v2634
        %2763 = vst [vmem:[%s285 + $0x1d8] sm:$0xff] %v2635
        %2764 = vst [vmem:[%s285 + $0x1e0] sm:$0xff] %v2636
        %2765 = vst [vmem:[%s285 + $0x1e8] sm:$0xff] %v2637
        %2766 = vst [vmem:[%s285 + $0x1f0] sm:$0xff] %v2638
        %2767 = vst [vmem:[%s285 + $0x1f8] sm:$0xff] %v2639
        %2768 = vst [vmem:[%s285 + $0x200] sm:$0xff] %v2640
        %2769 = vst [vmem:[%s285 + $0x208] sm:$0xff] %v2641
        %2770 = vst [vmem:[%s285 + $0x210] sm:$0xff] %v2642
        %2771 = vst [vmem:[%s285 + $0x218] sm:$0xff] %v2643
        %2772 = vst [vmem:[%s285 + $0x220] sm:$0xff] %v2644
        %2773 = vst [vmem:[%s285 + $0x228] sm:$0xff] %v2645
        %2774 = vst [vmem:[%s285 + $0x230] sm:$0xff] %v2646
        %2775 = vst [vmem:[%s285 + $0x238] sm:$0xff] %v2647
        %2776 = vst [vmem:[%s285 + $0x240] sm:$0xff] %v2648
        %2777 = vst [vmem:[%s285 + $0x248] sm:$0xff] %v2649
        %2778 = vst [vmem:[%s285 + $0x250] sm:$0xff] %v2650
        %2779 = vst [vmem:[%s285 + $0x258] sm:$0xff] %v2651
        %2780 = vst [vmem:[%s285 + $0x260] sm:$0xff] %v2652
        %2781 = vst [vmem:[%s285 + $0x268] sm:$0xff] %v2653
        %2782 = vst [vmem:[%s285 + $0x270] sm:$0xff] %v2654
        %2783 = vst [vmem:[%s285 + $0x278] sm:$0xff] %v2655
        %2784 = vst [vmem:[%s285 + $0x280] sm:$0xff] %v2656
        %2785 = vst [vmem:[%s285 + $0x288] sm:$0xff] %v2657
        %2786 = vst [vmem:[%s285 + $0x290] sm:$0xff] %v2658
        %2787 = vst [vmem:[%s285 + $0x298] sm:$0xff] %v2659
        %2788 = vst [vmem:[%s285 + $0x2a0] sm:$0xff] %v2660
        %2789 = vst [vmem:[%s285 + $0x2a8] sm:$0xff] %v2661
        %2790 = vst [vmem:[%s285 + $0x2b0] sm:$0xff] %v2662
        %2791 = vst [vmem:[%s285 + $0x2b8] sm:$0xff] %v2663
        %2792 = vst [vmem:[%s285 + $0x2c0] sm:$0xff] %v2664
        %2793 = vst [vmem:[%s285 + $0x2c8] sm:$0xff] %v2665
        %2794 = vst [vmem:[%s285 + $0x2d0] sm:$0xff] %v2666
        %2795 = vst [vmem:[%s285 + $0x2d8] sm:$0xff] %v2667
        %2796 = vst [vmem:[%s285 + $0x2e0] sm:$0xff] %v2668
        %2797 = vst [vmem:[%s285 + $0x2e8] sm:$0xff] %v2669
        %2798 = vst [vmem:[%s285 + $0x2f0] sm:$0xff] %v2670
        %2799 = vst [vmem:[%s285 + $0x2f8] sm:$0xff] %v2671
        %2800 = vst [vmem:[%s285 + $0x300] sm:$0xff] %v2672
        %2801 = vst [vmem:[%s285 + $0x308] sm:$0xff] %v2673
        %2802 = vst [vmem:[%s285 + $0x310] sm:$0xff] %v2674
        %2803 = vst [vmem:[%s285 + $0x318] sm:$0xff] %v2675
        %2804 = vst [vmem:[%s285 + $0x320] sm:$0xff] %v2676
        %2805 = vst [vmem:[%s285 + $0x328] sm:$0xff] %v2677
        %2806 = vst [vmem:[%s285 + $0x330] sm:$0xff] %v2678
        %2807 = vst [vmem:[%s285 + $0x338] sm:$0xff] %v2679
        %2808 = vst [vmem:[%s285 + $0x340] sm:$0xff] %v2680
        %2809 = vst [vmem:[%s285 + $0x348] sm:$0xff] %v2681
        %2810 = vst [vmem:[%s285 + $0x350] sm:$0xff] %v2682
        %2811 = vst [vmem:[%s285 + $0x358] sm:$0xff] %v2683
        %2812 = vst [vmem:[%s285 + $0x360] sm:$0xff] %v2684
        %2813 = vst [vmem:[%s285 + $0x368] sm:$0xff] %v2685
        %2814 = vst [vmem:[%s285 + $0x370] sm:$0xff] %v2686
        %2815 = vst [vmem:[%s285 + $0x378] sm:$0xff] %v2687
        %2816 = vst [vmem:[%s285 + $0x380] sm:$0xff] %v2688
        %2817 = vst [vmem:[%s285 + $0x388] sm:$0xff] %v2689
        %2818 = vst [vmem:[%s285 + $0x390] sm:$0xff] %v2690
        %2819 = vst [vmem:[%s285 + $0x398] sm:$0xff] %v2691
        %2820 = vst [vmem:[%s285 + $0x3a0] sm:$0xff] %v2692
        %2821 = vst [vmem:[%s285 + $0x3a8] sm:$0xff] %v2693
        %2822 = vst [vmem:[%s285 + $0x3b0] sm:$0xff] %v2694
        %2823 = vst [vmem:[%s285 + $0x3b8] sm:$0xff] %v2695
        %2824 = vst [vmem:[%s285 + $0x3c0] sm:$0xff] %v2696
        %2825 = vst [vmem:[%s285 + $0x3c8] sm:$0xff] %v2697
        %2826 = vst [vmem:[%s285 + $0x3d0] sm:$0xff] %v2698
        %2827 = vst [vmem:[%s285 + $0x3d8] sm:$0xff] %v2699
        %2828 = vst [vmem:[%s285 + $0x3e0] sm:$0xff] %v2700
        %2829 = vst [vmem:[%s285 + $0x3e8] sm:$0xff] %v2701
        %2830 = vst [vmem:[%s285 + $0x3f0] sm:$0xff] %v2702
        %2831 = vst [vmem:[%s285 + $0x3f8] sm:$0xff] %v2703
        %s2832 = sand.u32 %s146, 1
        %s2833 = scalar_lea.sflag [#allocation4], %s2832
        %s2834 = sand.u32 %s146, 1
        %s2835 = smul.addr %s2834, 1024
        %s2836 = scalar_lea.vmem [#allocation7], %s2835
        // Predicated region
        $region45: #{tpu_custom_call.1} parent=35 // pred_check
          %p2837 = pneg %p156
        $region46: #{tpu_custom_call.1} parent=35 // pred_check_branch
          %2839 = sbr.rel (%p2837) target = $region48
        $region47: #{tpu_custom_call.1} parent=35 // pred_region
          %s2840 = smul.u32 16, %s27
          %s2842 = ssub.s32 16384, 16384
          %2843 = vsyncadd %s2833, %s2842
          %s2844 = smul.addr %s26, 128
          %s2845 = sadd.s32 %s2840, %s2844
          %s2846 = smul.addr %s2845, 128
          %s2847 = scalar_lea.hbm %s4, %s2846
          %s2848 = sshll.u32 %s2836, 4
          %s2849 = int_to_ptr.vmem [resolvable:$true] %s2848
          %2854 = dma.vmem_to_hbm [thread:$0]  %s2849, 16384, %s2847, %s2833, 2048, 2048, 128
        $region48: #{tpu_custom_call.1} parent=35 // pred_fallthru
          _
      $region36: #{tpu_custom_call.1} parent=5 // pred_fallthru
        _
      %p2855 = scmp.le.s32.totalorder 2, %s17
      // Predicated region
      $region49: #{tpu_custom_call.1} parent=5 // pred_check
        %p2856 = pneg %p2855
      $region50: #{tpu_custom_call.1} parent=5 // pred_check_branch
        %2858 = sbr.rel (%p2856) target = $region52
      $region51: #{tpu_custom_call.1} parent=5 // pred_region
        %s2859 = ssub.s32 %s17, 2
        // Predicated region
        $region53: #{tpu_custom_call.1} parent=51 // pred_check
          %p2860 = pneg %p162
        $region54: #{tpu_custom_call.1} parent=51 // pred_check_branch
          %2862 = sbr.rel (%p2860) target = $region56
        $region55: #{tpu_custom_call.1} parent=51 // pred_region
          %s2863 = sand.u32 %s147, 1
          %s2864 = scalar_lea.sflag [#allocation4], %s2863
          %s2865 = sand.u32 %s147, 1
          %s2866 = smul.addr %s2865, 1024
          %s2867 = scalar_lea.vmem [#allocation7], %s2866
          %2868 = dma.done %s2864, 16384
        $region56: #{tpu_custom_call.1} parent=51 // pred_fallthru
          _
      $region52: #{tpu_custom_call.1} parent=5 // pred_fallthru
        _
    $region6: #{tpu_custom_call.1} parent=1 // loop_footer
      %s21 = sadd.s32 1, %s17
    $region7: #{tpu_custom_call.1} parent=1 // loop_footer_branch
      %16 = sbr.rel target = $region3
    $region8: #{tpu_custom_call.1} parent=1 // loop_exit
      _
    %2869 = vsyncpa [#allocation3], 1
    %s2870 = scalar_lea.sflag [#allocation3], 1
    %2871 = vsyncpa %s2870, 1
    %2872 = vsyncpa [#allocation6], 1
    %2873 = vsyncpa [#allocation4], 1
    %s2874 = scalar_lea.sflag [#allocation4], 1
    %2875 = vsyncpa %s2874, 1

</llo_original>
